<compile_context>
chip_gen: v7x
topology: tpu7x:2x2x1
jax: 0.10.0
libtpu: 0.0.40
codegen_flags: <defaults>
</compile_context>

<pallas_src>
import functools

import jax
import jax.numpy as jnp
from jax.experimental import pallas as pl
from jax.experimental.pallas import tpu as pltpu


def _round_up(x, m):
    return (x + m - 1) // m * m


def lstm_tagger_kernel(ids_ref, valid_ref, emb_ref, w_ih_ref, w_hh_ref, b_ref,
                       w_out_ref, b_out_ref, out_ref):
    # ids_ref / valid_ref are time-major flattened: row t*B + b is timestep t
    # of (padded) batch element b.
    TB = ids_ref.shape[0]
    B = out_ref.shape[0]
    T = TB // B
    Vp = emb_ref.shape[0]
    H = w_hh_ref.shape[0]

    # ---- Fused embedding lookup (gather-as-matmul) + input projection ------
    ids = ids_ref[...]                                          # [T*B, 1] i32
    one_hot = (jax.lax.broadcasted_iota(jnp.int32, (TB, Vp), 1)
               == ids).astype(jnp.float32)                      # [T*B, Vp]
    embeds = jnp.dot(one_hot, emb_ref[...],
                     preferred_element_type=jnp.float32)        # [T*B, E]
    # Hoisted input projection: one matmul (+ one bias broadcast) for all T.
    gates_x = (jnp.dot(embeds, w_ih_ref[...],
                       preferred_element_type=jnp.float32)
               + b_ref[...])                                    # [T*B, 4H]

    w_hh = w_hh_ref[...]
    valid_all = valid_ref[...]                                  # [T*B, 1] f32

    h = jnp.zeros((B, H), jnp.float32)
    c = jnp.zeros((B, H), jnp.float32)
    acc = jnp.zeros((B, H), jnp.float32)

    # ---- Fully unrolled recurrence (T static & small) -----------------------
    # TODO(synk): consider a VPU formulation (H broadcast-FMAs) for h @ w_hh
    # if bundle dumps show the per-step MXU push/pop round trip dominating.
    for t in range(T):
        gates = gates_x[t * B:(t + 1) * B, :] + jnp.dot(
            h, w_hh, preferred_element_type=jnp.float32)        # [B, 4H]

        # Full-width activations (one sigmoid + one tanh push over 4H lanes);
        # gate slices taken afterwards.  Packed gate order: f, i, g, o.
        sig = jax.nn.sigmoid(gates)
        tnh = jnp.tanh(gates)
        f_g = sig[:, 0 * H:1 * H]       # lanes 0:H -> aligned with carried c
        i_g = sig[:, 1 * H:2 * H]
        g_g = tnh[:, 2 * H:3 * H]
        o_g = sig[:, 3 * H:4 * H]

        c_new = f_g * c + i_g * g_g
        h_new = o_g * jnp.tanh(c_new)

        # pack_padded_sequence semantics: state frozen at padded steps, and
        # padded positions contribute 0 to the mean (pad_packed zero-pads).
        valid = valid_all[t * B:(t + 1) * B, :]                 # [B, 1] f32
        c = c + valid * (c_new - c)
        h = h + valid * (h_new - h)
        acc = acc + valid * h_new

    # torch.mean over the pad_packed output divides by padded length == T
    # (not by per-sequence lengths) -- matches the reference module exactly.
    mean = acc * (1.0 / jnp.float32(T))
    logits = (jnp.dot(mean, w_out_ref[...],
                      preferred_element_type=jnp.float32)
              + b_out_ref[...])                                 # [B, TAGP]
    out_ref[...] = jnp.tanh(logits)


@functools.partial(jax.jit, static_argnames=("tagset_size",))
def lstm_tagger_forward(sentence, lengths, emb_table_pad, w_ih, w_hh, b,
                        w_out_pad, b_out_pad, *, tagset_size):
    """sentence: [B, T] int32; lengths: [B] int32 (sorted desc, max == T)."""
    B, T = sentence.shape
    Vp, E = emb_table_pad.shape
    H = w_hh.shape[0]
    TAGP = w_out_pad.shape[1]
    B_pad = _round_up(max(B, 8), 8)     # fill the 8-sublane dim of every vreg

    # Tiny layout plumbing, fused into this jit: pad the batch, time-major
    # flatten the int ids, and precompute the validity mask once.
    sent_p = jnp.zeros((B_pad, T), jnp.int32).at[:B, :].set(sentence)
    len_p = jnp.zeros((B_pad,), jnp.int32).at[:B].set(lengths)
    ids_tm = jnp.transpose(sent_p, (1, 0)).reshape(T * B_pad, 1)
    valid = (jnp.arange(T, dtype=jnp.int32)[:, None]
             < len_p[None, :]).astype(jnp.float32).reshape(T * B_pad, 1)

    TB = T * B_pad
    flops = (2 * TB * Vp * E                # one-hot embedding gather
             + 2 * TB * E * 4 * H           # hoisted input projection
             + 2 * T * B_pad * H * 4 * H    # recurrent matmuls
             + 2 * B_pad * H * TAGP         # output projection
             + 10 * T * B_pad * H)          # elementwise cell update (approx)
    transcendentals = T * B_pad * 9 * H + B_pad * TAGP
    bytes_accessed = 4 * (2 * TB + Vp * E + E * 4 * H + H * 4 * H + 4 * H
                          + H * TAGP + TAGP + B_pad * TAGP)

    vmem = pl.BlockSpec(memory_space=pltpu.MemorySpace.VMEM)
    out_pad = pl.pallas_call(
        lstm_tagger_kernel,
        out_shape=jax.ShapeDtypeStruct((B_pad, TAGP), jnp.float32),
        in_specs=[vmem] * 8,
        out_specs=vmem,
        cost_estimate=pl.CostEstimate(flops=flops,
                                      transcendentals=transcendentals,
                                      bytes_accessed=bytes_accessed),
    )(ids_tm, valid, emb_table_pad, w_ih, w_hh, b, w_out_pad, b_out_pad)
    return out_pad[:B, :tagset_size]


def repack_lstm_gates(w_ih_t, w_hh_t, b_ih_t, b_hh_t, H):
    """PyTorch packs LSTM gate rows as [i, f, g, o] with shapes (4H, in_dim).
    Repack as columns of x @ W with gate order [f, i, g, o] so the forget
    gate lands in lanes 0:H inside the kernel (no rotate vs. carried c)."""
    def cols(w):                                    # (4H, in) -> (in, 4H)
        i, f, g, o = w[0:H], w[H:2 * H], w[2 * H:3 * H], w[3 * H:4 * H]
        return jnp.concatenate([f, i, g, o], axis=0).T
    def bias(bv):                                   # (4H,) -> (1, 4H)
        i, f, g, o = bv[0:H], bv[H:2 * H], bv[2 * H:3 * H], bv[3 * H:4 * H]
        return jnp.concatenate([f, i, g, o]).reshape(1, 4 * H)
    return cols(w_ih_t), cols(w_hh_t), bias(b_ih_t) + bias(b_hh_t)


if __name__ == "__main__":
    # Small deterministic configuration consistent with the module.
    B, T = 2, 8
    E = 16                 # embedding_dim
    H = 32                 # option['hidden_size']
    vocab_size = 20
    tagset_size = 5
    # option = {'hidden_size': 32, 'num_layers': 1, 'bidirectional': False}
    # TODO(synk): multi-layer / bidirectional variants of nn.LSTM not implemented.

    key = jax.random.PRNGKey(0)
    keys = jax.random.split(key, 8)

    emb_table = jax.random.normal(keys[0], (vocab_size, E), jnp.float32) * 0.1
    # PyTorch-layout LSTM parameters: (4H, E), (4H, H), (4H,), (4H,).
    w_ih_t = jax.random.normal(keys[1], (4 * H, E), jnp.float32) * 0.1
    w_hh_t = jax.random.normal(keys[2], (4 * H, H), jnp.float32) * 0.1
    b_ih_t = jax.random.normal(keys[3], (4 * H,), jnp.float32) * 0.1
    b_hh_t = jax.random.normal(keys[4], (4 * H,), jnp.float32) * 0.1
    w_out = jax.random.normal(keys[5], (H, tagset_size), jnp.float32) * 0.1
    b_out = jax.random.normal(keys[6], (tagset_size,), jnp.float32) * 0.1

    sentence = jax.random.randint(keys[7], (B, T), 0, vocab_size, jnp.int32)
    # pack_padded_sequence requires lengths sorted descending; max == T.
    lengths = jnp.array([T, 5], dtype=jnp.int32)
    assert int(jnp.max(lengths)) == T

    # ---- One-time weight packing (off the hot path) -------------------------
    w_ih, w_hh, b = repack_lstm_gates(w_ih_t, w_hh_t, b_ih_t, b_hh_t, H)
    # Pad the vocab to a sublane multiple (zero rows never selected by ids).
    V_PAD = _round_up(vocab_size, 8)
    emb_table_pad = (jnp.zeros((V_PAD, E), jnp.float32)
                     .at[:vocab_size].set(emb_table))
    # Lane-dense output: pad tagset columns to 128 (sliced after the call).
    TAG_PAD = 128
    w_out_pad = (jnp.zeros((H, TAG_PAD), jnp.float32)
                 .at[:, :tagset_size].set(w_out))
    b_out_pad = (jnp.zeros((1, TAG_PAD), jnp.float32)
                 .at[0, :tagset_size].set(b_out))

    out = lstm_tagger_forward(sentence, lengths, emb_table_pad, w_ih, w_hh, b,
                              w_out_pad, b_out_pad, tagset_size=tagset_size)
    jax.block_until_ready(out)
    assert out.shape == (B, tagset_size)
    print("KERNEL_OK")
</pallas_src>

<mosaic_0001>
module attributes {stable_mosaic.version = 11 : i64} {
  func.func @lstm_tagger_kernel(%arg0: memref<64x1xi32, #tpu.memory_space<vmem>>, %arg1: memref<64x1xf32, #tpu.memory_space<vmem>>, %arg2: memref<24x16xf32, #tpu.memory_space<vmem>>, %arg3: memref<16x128xf32, #tpu.memory_space<vmem>>, %arg4: memref<32x128xf32, #tpu.memory_space<vmem>>, %arg5: memref<1x128xf32, #tpu.memory_space<vmem>>, %arg6: memref<32x128xf32, #tpu.memory_space<vmem>>, %arg7: memref<1x128xf32, #tpu.memory_space<vmem>>, %arg8: memref<8x128xf32, #tpu.memory_space<vmem>>) attributes {dimension_semantics = [], scalar_prefetch = 0 : i64, scratch_operands = 0 : i64, tpu.core_type = #tpu.core_type<tc>} {
    %c0 = arith.constant 0 : index
    %c0_0 = arith.constant 0 : index
    %0 = vector.load %arg0[%c0, %c0_0] : memref<64x1xi32, #tpu.memory_space<vmem>>, vector<64x1xi32>
    %1 = tpu.iota {dimensions = array<i32: 1>} : vector<64x24xi32>
    %2 = vector.broadcast %0 : vector<64x1xi32> to vector<64x24xi32>
    %3 = arith.cmpi eq, %1, %2 : vector<64x24xi32>
    %4 = arith.extui %3 : vector<64x24xi1> to vector<64x24xi32>
    %5 = arith.sitofp %4 : vector<64x24xi32> to vector<64x24xf32>
    %c0_1 = arith.constant 0 : index
    %c0_2 = arith.constant 0 : index
    %6 = vector.load %arg2[%c0_1, %c0_2] : memref<24x16xf32, #tpu.memory_space<vmem>>, vector<24x16xf32>
    %cst = arith.constant dense<0.000000e+00> : vector<64x16xf32>
    %7 = tpu.matmul %5, %6, %cst {dimension_numbers = #tpu.dot_dimension_numbers<[1], [0], [0], [1], [0, 0, 1, 1], [], []>} : vector<64x24xf32>, vector<24x16xf32>, vector<64x16xf32> -> vector<64x16xf32>
    %c0_3 = arith.constant 0 : index
    %c0_4 = arith.constant 0 : index
    %8 = vector.load %arg3[%c0_3, %c0_4] : memref<16x128xf32, #tpu.memory_space<vmem>>, vector<16x128xf32>
    %cst_5 = arith.constant dense<0.000000e+00> : vector<64x128xf32>
    %9 = tpu.matmul %7, %8, %cst_5 {dimension_numbers = #tpu.dot_dimension_numbers<[1], [0], [0], [1], [0, 0, 1, 1], [], []>} : vector<64x16xf32>, vector<16x128xf32>, vector<64x128xf32> -> vector<64x128xf32>
    %c0_6 = arith.constant 0 : index
    %c0_7 = arith.constant 0 : index
    %10 = vector.load %arg5[%c0_6, %c0_7] : memref<1x128xf32, #tpu.memory_space<vmem>>, vector<1x128xf32>
    %11 = vector.broadcast %10 : vector<1x128xf32> to vector<64x128xf32>
    %12 = arith.addf %9, %11 : vector<64x128xf32>
    %c0_8 = arith.constant 0 : index
    %c0_9 = arith.constant 0 : index
    %13 = vector.load %arg4[%c0_8, %c0_9] : memref<32x128xf32, #tpu.memory_space<vmem>>, vector<32x128xf32>
    %c0_10 = arith.constant 0 : index
    %c0_11 = arith.constant 0 : index
    %14 = vector.load %arg1[%c0_10, %c0_11] : memref<64x1xf32, #tpu.memory_space<vmem>>, vector<64x1xf32>
    %cst_12 = arith.constant 0.000000e+00 : f32
    %15 = vector.broadcast %cst_12 : f32 to vector<8x32xf32>
    %cst_13 = arith.constant 0.000000e+00 : f32
    %16 = vector.broadcast %cst_13 : f32 to vector<8x32xf32>
    %cst_14 = arith.constant 0.000000e+00 : f32
    %17 = vector.broadcast %cst_14 : f32 to vector<8x32xf32>
    %18 = vector.extract_strided_slice %12 {offsets = [0, 0], sizes = [8, 128], strides = [1, 1]} : vector<64x128xf32> to vector<8x128xf32>
    %cst_15 = arith.constant dense<0.000000e+00> : vector<8x128xf32>
    %19 = tpu.matmul %15, %13, %cst_15 {dimension_numbers = #tpu.dot_dimension_numbers<[1], [0], [0], [1], [0, 0, 1, 1], [], []>} : vector<8x32xf32>, vector<32x128xf32>, vector<8x128xf32> -> vector<8x128xf32>
    %20 = arith.addf %18, %19 : vector<8x128xf32>
    %21 = arith.negf %20 : vector<8x128xf32>
    %22 = math.exp %21 : vector<8x128xf32>
    %cst_16 = arith.constant 1.000000e+00 : f32
    %23 = vector.broadcast %cst_16 : f32 to vector<8x128xf32>
    %24 = arith.addf %23, %22 : vector<8x128xf32>
    %25 = arith.divf %23, %24 : vector<8x128xf32>
    %26 = math.tanh %20 : vector<8x128xf32>
    %27 = vector.extract_strided_slice %25 {offsets = [0, 0], sizes = [8, 32], strides = [1, 1]} : vector<8x128xf32> to vector<8x32xf32>
    %28 = vector.extract_strided_slice %25 {offsets = [0, 32], sizes = [8, 32], strides = [1, 1]} : vector<8x128xf32> to vector<8x32xf32>
    %29 = vector.extract_strided_slice %26 {offsets = [0, 64], sizes = [8, 32], strides = [1, 1]} : vector<8x128xf32> to vector<8x32xf32>
    %30 = vector.extract_strided_slice %25 {offsets = [0, 96], sizes = [8, 32], strides = [1, 1]} : vector<8x128xf32> to vector<8x32xf32>
    %31 = arith.mulf %27, %16 : vector<8x32xf32>
    %32 = arith.mulf %28, %29 : vector<8x32xf32>
    %33 = arith.addf %31, %32 : vector<8x32xf32>
    %34 = math.tanh %33 : vector<8x32xf32>
    %35 = arith.mulf %30, %34 : vector<8x32xf32>
    %36 = vector.extract_strided_slice %14 {offsets = [0, 0], sizes = [8, 1], strides = [1, 1]} : vector<64x1xf32> to vector<8x1xf32>
    %37 = arith.subf %33, %16 : vector<8x32xf32>
    %38 = vector.broadcast %36 : vector<8x1xf32> to vector<8x32xf32>
    %39 = arith.mulf %38, %37 : vector<8x32xf32>
    %40 = arith.addf %16, %39 : vector<8x32xf32>
    %41 = arith.subf %35, %15 : vector<8x32xf32>
    %42 = vector.broadcast %36 : vector<8x1xf32> to vector<8x32xf32>
    %43 = arith.mulf %42, %41 : vector<8x32xf32>
    %44 = arith.addf %15, %43 : vector<8x32xf32>
    %45 = vector.broadcast %36 : vector<8x1xf32> to vector<8x32xf32>
    %46 = arith.mulf %45, %35 : vector<8x32xf32>
    %47 = arith.addf %17, %46 : vector<8x32xf32>
    %48 = vector.extract_strided_slice %12 {offsets = [8, 0], sizes = [8, 128], strides = [1, 1]} : vector<64x128xf32> to vector<8x128xf32>
    %cst_17 = arith.constant dense<0.000000e+00> : vector<8x128xf32>
    %49 = tpu.matmul %44, %13, %cst_17 {dimension_numbers = #tpu.dot_dimension_numbers<[1], [0], [0], [1], [0, 0, 1, 1], [], []>} : vector<8x32xf32>, vector<32x128xf32>, vector<8x128xf32> -> vector<8x128xf32>
    %50 = arith.addf %48, %49 : vector<8x128xf32>
    %51 = arith.negf %50 : vector<8x128xf32>
    %52 = math.exp %51 : vector<8x128xf32>
    %cst_18 = arith.constant 1.000000e+00 : f32
    %53 = vector.broadcast %cst_18 : f32 to vector<8x128xf32>
    %54 = arith.addf %53, %52 : vector<8x128xf32>
    %55 = arith.divf %53, %54 : vector<8x128xf32>
    %56 = math.tanh %50 : vector<8x128xf32>
    %57 = vector.extract_strided_slice %55 {offsets = [0, 0], sizes = [8, 32], strides = [1, 1]} : vector<8x128xf32> to vector<8x32xf32>
    %58 = vector.extract_strided_slice %55 {offsets = [0, 32], sizes = [8, 32], strides = [1, 1]} : vector<8x128xf32> to vector<8x32xf32>
    %59 = vector.extract_strided_slice %56 {offsets = [0, 64], sizes = [8, 32], strides = [1, 1]} : vector<8x128xf32> to vector<8x32xf32>
    %60 = vector.extract_strided_slice %55 {offsets = [0, 96], sizes = [8, 32], strides = [1, 1]} : vector<8x128xf32> to vector<8x32xf32>
    %61 = arith.mulf %57, %40 : vector<8x32xf32>
    %62 = arith.mulf %58, %59 : vector<8x32xf32>
    %63 = arith.addf %61, %62 : vector<8x32xf32>
    %64 = math.tanh %63 : vector<8x32xf32>
    %65 = arith.mulf %60, %64 : vector<8x32xf32>
    %66 = vector.extract_strided_slice %14 {offsets = [8, 0], sizes = [8, 1], strides = [1, 1]} : vector<64x1xf32> to vector<8x1xf32>
    %67 = arith.subf %63, %40 : vector<8x32xf32>
    %68 = vector.broadcast %66 : vector<8x1xf32> to vector<8x32xf32>
    %69 = arith.mulf %68, %67 : vector<8x32xf32>
    %70 = arith.addf %40, %69 : vector<8x32xf32>
    %71 = arith.subf %65, %44 : vector<8x32xf32>
    %72 = vector.broadcast %66 : vector<8x1xf32> to vector<8x32xf32>
    %73 = arith.mulf %72, %71 : vector<8x32xf32>
    %74 = arith.addf %44, %73 : vector<8x32xf32>
    %75 = vector.broadcast %66 : vector<8x1xf32> to vector<8x32xf32>
    %76 = arith.mulf %75, %65 : vector<8x32xf32>
    %77 = arith.addf %47, %76 : vector<8x32xf32>
    %78 = vector.extract_strided_slice %12 {offsets = [16, 0], sizes = [8, 128], strides = [1, 1]} : vector<64x128xf32> to vector<8x128xf32>
    %cst_19 = arith.constant dense<0.000000e+00> : vector<8x128xf32>
    %79 = tpu.matmul %74, %13, %cst_19 {dimension_numbers = #tpu.dot_dimension_numbers<[1], [0], [0], [1], [0, 0, 1, 1], [], []>} : vector<8x32xf32>, vector<32x128xf32>, vector<8x128xf32> -> vector<8x128xf32>
    %80 = arith.addf %78, %79 : vector<8x128xf32>
    %81 = arith.negf %80 : vector<8x128xf32>
    %82 = math.exp %81 : vector<8x128xf32>
    %cst_20 = arith.constant 1.000000e+00 : f32
    %83 = vector.broadcast %cst_20 : f32 to vector<8x128xf32>
    %84 = arith.addf %83, %82 : vector<8x128xf32>
    %85 = arith.divf %83, %84 : vector<8x128xf32>
    %86 = math.tanh %80 : vector<8x128xf32>
    %87 = vector.extract_strided_slice %85 {offsets = [0, 0], sizes = [8, 32], strides = [1, 1]} : vector<8x128xf32> to vector<8x32xf32>
    %88 = vector.extract_strided_slice %85 {offsets = [0, 32], sizes = [8, 32], strides = [1, 1]} : vector<8x128xf32> to vector<8x32xf32>
    %89 = vector.extract_strided_slice %86 {offsets = [0, 64], sizes = [8, 32], strides = [1, 1]} : vector<8x128xf32> to vector<8x32xf32>
    %90 = vector.extract_strided_slice %85 {offsets = [0, 96], sizes = [8, 32], strides = [1, 1]} : vector<8x128xf32> to vector<8x32xf32>
    %91 = arith.mulf %87, %70 : vector<8x32xf32>
    %92 = arith.mulf %88, %89 : vector<8x32xf32>
    %93 = arith.addf %91, %92 : vector<8x32xf32>
    %94 = math.tanh %93 : vector<8x32xf32>
    %95 = arith.mulf %90, %94 : vector<8x32xf32>
    %96 = vector.extract_strided_slice %14 {offsets = [16, 0], sizes = [8, 1], strides = [1, 1]} : vector<64x1xf32> to vector<8x1xf32>
    %97 = arith.subf %93, %70 : vector<8x32xf32>
    %98 = vector.broadcast %96 : vector<8x1xf32> to vector<8x32xf32>
    %99 = arith.mulf %98, %97 : vector<8x32xf32>
    %100 = arith.addf %70, %99 : vector<8x32xf32>
    %101 = arith.subf %95, %74 : vector<8x32xf32>
    %102 = vector.broadcast %96 : vector<8x1xf32> to vector<8x32xf32>
    %103 = arith.mulf %102, %101 : vector<8x32xf32>
    %104 = arith.addf %74, %103 : vector<8x32xf32>
    %105 = vector.broadcast %96 : vector<8x1xf32> to vector<8x32xf32>
    %106 = arith.mulf %105, %95 : vector<8x32xf32>
    %107 = arith.addf %77, %106 : vector<8x32xf32>
    %108 = vector.extract_strided_slice %12 {offsets = [24, 0], sizes = [8, 128], strides = [1, 1]} : vector<64x128xf32> to vector<8x128xf32>
    %cst_21 = arith.constant dense<0.000000e+00> : vector<8x128xf32>
    %109 = tpu.matmul %104, %13, %cst_21 {dimension_numbers = #tpu.dot_dimension_numbers<[1], [0], [0], [1], [0, 0, 1, 1], [], []>} : vector<8x32xf32>, vector<32x128xf32>, vector<8x128xf32> -> vector<8x128xf32>
    %110 = arith.addf %108, %109 : vector<8x128xf32>
    %111 = arith.negf %110 : vector<8x128xf32>
    %112 = math.exp %111 : vector<8x128xf32>
    %cst_22 = arith.constant 1.000000e+00 : f32
    %113 = vector.broadcast %cst_22 : f32 to vector<8x128xf32>
    %114 = arith.addf %113, %112 : vector<8x128xf32>
    %115 = arith.divf %113, %114 : vector<8x128xf32>
    %116 = math.tanh %110 : vector<8x128xf32>
    %117 = vector.extract_strided_slice %115 {offsets = [0, 0], sizes = [8, 32], strides = [1, 1]} : vector<8x128xf32> to vector<8x32xf32>
    %118 = vector.extract_strided_slice %115 {offsets = [0, 32], sizes = [8, 32], strides = [1, 1]} : vector<8x128xf32> to vector<8x32xf32>
    %119 = vector.extract_strided_slice %116 {offsets = [0, 64], sizes = [8, 32], strides = [1, 1]} : vector<8x128xf32> to vector<8x32xf32>
    %120 = vector.extract_strided_slice %115 {offsets = [0, 96], sizes = [8, 32], strides = [1, 1]} : vector<8x128xf32> to vector<8x32xf32>
    %121 = arith.mulf %117, %100 : vector<8x32xf32>
    %122 = arith.mulf %118, %119 : vector<8x32xf32>
    %123 = arith.addf %121, %122 : vector<8x32xf32>
    %124 = math.tanh %123 : vector<8x32xf32>
    %125 = arith.mulf %120, %124 : vector<8x32xf32>
    %126 = vector.extract_strided_slice %14 {offsets = [24, 0], sizes = [8, 1], strides = [1, 1]} : vector<64x1xf32> to vector<8x1xf32>
    %127 = arith.subf %123, %100 : vector<8x32xf32>
    %128 = vector.broadcast %126 : vector<8x1xf32> to vector<8x32xf32>
    %129 = arith.mulf %128, %127 : vector<8x32xf32>
    %130 = arith.addf %100, %129 : vector<8x32xf32>
    %131 = arith.subf %125, %104 : vector<8x32xf32>
    %132 = vector.broadcast %126 : vector<8x1xf32> to vector<8x32xf32>
    %133 = arith.mulf %132, %131 : vector<8x32xf32>
    %134 = arith.addf %104, %133 : vector<8x32xf32>
    %135 = vector.broadcast %126 : vector<8x1xf32> to vector<8x32xf32>
    %136 = arith.mulf %135, %125 : vector<8x32xf32>
    %137 = arith.addf %107, %136 : vector<8x32xf32>
    %138 = vector.extract_strided_slice %12 {offsets = [32, 0], sizes = [8, 128], strides = [1, 1]} : vector<64x128xf32> to vector<8x128xf32>
    %cst_23 = arith.constant dense<0.000000e+00> : vector<8x128xf32>
    %139 = tpu.matmul %134, %13, %cst_23 {dimension_numbers = #tpu.dot_dimension_numbers<[1], [0], [0], [1], [0, 0, 1, 1], [], []>} : vector<8x32xf32>, vector<32x128xf32>, vector<8x128xf32> -> vector<8x128xf32>
    %140 = arith.addf %138, %139 : vector<8x128xf32>
    %141 = arith.negf %140 : vector<8x128xf32>
    %142 = math.exp %141 : vector<8x128xf32>
    %cst_24 = arith.constant 1.000000e+00 : f32
    %143 = vector.broadcast %cst_24 : f32 to vector<8x128xf32>
    %144 = arith.addf %143, %142 : vector<8x128xf32>
    %145 = arith.divf %143, %144 : vector<8x128xf32>
    %146 = math.tanh %140 : vector<8x128xf32>
    %147 = vector.extract_strided_slice %145 {offsets = [0, 0], sizes = [8, 32], strides = [1, 1]} : vector<8x128xf32> to vector<8x32xf32>
    %148 = vector.extract_strided_slice %145 {offsets = [0, 32], sizes = [8, 32], strides = [1, 1]} : vector<8x128xf32> to vector<8x32xf32>
    %149 = vector.extract_strided_slice %146 {offsets = [0, 64], sizes = [8, 32], strides = [1, 1]} : vector<8x128xf32> to vector<8x32xf32>
    %150 = vector.extract_strided_slice %145 {offsets = [0, 96], sizes = [8, 32], strides = [1, 1]} : vector<8x128xf32> to vector<8x32xf32>
    %151 = arith.mulf %147, %130 : vector<8x32xf32>
    %152 = arith.mulf %148, %149 : vector<8x32xf32>
    %153 = arith.addf %151, %152 : vector<8x32xf32>
    %154 = math.tanh %153 : vector<8x32xf32>
    %155 = arith.mulf %150, %154 : vector<8x32xf32>
    %156 = vector.extract_strided_slice %14 {offsets = [32, 0], sizes = [8, 1], strides = [1, 1]} : vector<64x1xf32> to vector<8x1xf32>
    %157 = arith.subf %153, %130 : vector<8x32xf32>
    %158 = vector.broadcast %156 : vector<8x1xf32> to vector<8x32xf32>
    %159 = arith.mulf %158, %157 : vector<8x32xf32>
    %160 = arith.addf %130, %159 : vector<8x32xf32>
    %161 = arith.subf %155, %134 : vector<8x32xf32>
    %162 = vector.broadcast %156 : vector<8x1xf32> to vector<8x32xf32>
    %163 = arith.mulf %162, %161 : vector<8x32xf32>
    %164 = arith.addf %134, %163 : vector<8x32xf32>
    %165 = vector.broadcast %156 : vector<8x1xf32> to vector<8x32xf32>
    %166 = arith.mulf %165, %155 : vector<8x32xf32>
    %167 = arith.addf %137, %166 : vector<8x32xf32>
    %168 = vector.extract_strided_slice %12 {offsets = [40, 0], sizes = [8, 128], strides = [1, 1]} : vector<64x128xf32> to vector<8x128xf32>
    %cst_25 = arith.constant dense<0.000000e+00> : vector<8x128xf32>
    %169 = tpu.matmul %164, %13, %cst_25 {dimension_numbers = #tpu.dot_dimension_numbers<[1], [0], [0], [1], [0, 0, 1, 1], [], []>} : vector<8x32xf32>, vector<32x128xf32>, vector<8x128xf32> -> vector<8x128xf32>
    %170 = arith.addf %168, %169 : vector<8x128xf32>
    %171 = arith.negf %170 : vector<8x128xf32>
    %172 = math.exp %171 : vector<8x128xf32>
    %cst_26 = arith.constant 1.000000e+00 : f32
    %173 = vector.broadcast %cst_26 : f32 to vector<8x128xf32>
    %174 = arith.addf %173, %172 : vector<8x128xf32>
    %175 = arith.divf %173, %174 : vector<8x128xf32>
    %176 = math.tanh %170 : vector<8x128xf32>
    %177 = vector.extract_strided_slice %175 {offsets = [0, 0], sizes = [8, 32], strides = [1, 1]} : vector<8x128xf32> to vector<8x32xf32>
    %178 = vector.extract_strided_slice %175 {offsets = [0, 32], sizes = [8, 32], strides = [1, 1]} : vector<8x128xf32> to vector<8x32xf32>
    %179 = vector.extract_strided_slice %176 {offsets = [0, 64], sizes = [8, 32], strides = [1, 1]} : vector<8x128xf32> to vector<8x32xf32>
    %180 = vector.extract_strided_slice %175 {offsets = [0, 96], sizes = [8, 32], strides = [1, 1]} : vector<8x128xf32> to vector<8x32xf32>
    %181 = arith.mulf %177, %160 : vector<8x32xf32>
    %182 = arith.mulf %178, %179 : vector<8x32xf32>
    %183 = arith.addf %181, %182 : vector<8x32xf32>
    %184 = math.tanh %183 : vector<8x32xf32>
    %185 = arith.mulf %180, %184 : vector<8x32xf32>
    %186 = vector.extract_strided_slice %14 {offsets = [40, 0], sizes = [8, 1], strides = [1, 1]} : vector<64x1xf32> to vector<8x1xf32>
    %187 = arith.subf %183, %160 : vector<8x32xf32>
    %188 = vector.broadcast %186 : vector<8x1xf32> to vector<8x32xf32>
    %189 = arith.mulf %188, %187 : vector<8x32xf32>
    %190 = arith.addf %160, %189 : vector<8x32xf32>
    %191 = arith.subf %185, %164 : vector<8x32xf32>
    %192 = vector.broadcast %186 : vector<8x1xf32> to vector<8x32xf32>
    %193 = arith.mulf %192, %191 : vector<8x32xf32>
    %194 = arith.addf %164, %193 : vector<8x32xf32>
    %195 = vector.broadcast %186 : vector<8x1xf32> to vector<8x32xf32>
    %196 = arith.mulf %195, %185 : vector<8x32xf32>
    %197 = arith.addf %167, %196 : vector<8x32xf32>
    %198 = vector.extract_strided_slice %12 {offsets = [48, 0], sizes = [8, 128], strides = [1, 1]} : vector<64x128xf32> to vector<8x128xf32>
    %cst_27 = arith.constant dense<0.000000e+00> : vector<8x128xf32>
    %199 = tpu.matmul %194, %13, %cst_27 {dimension_numbers = #tpu.dot_dimension_numbers<[1], [0], [0], [1], [0, 0, 1, 1], [], []>} : vector<8x32xf32>, vector<32x128xf32>, vector<8x128xf32> -> vector<8x128xf32>
    %200 = arith.addf %198, %199 : vector<8x128xf32>
    %201 = arith.negf %200 : vector<8x128xf32>
    %202 = math.exp %201 : vector<8x128xf32>
    %cst_28 = arith.constant 1.000000e+00 : f32
    %203 = vector.broadcast %cst_28 : f32 to vector<8x128xf32>
    %204 = arith.addf %203, %202 : vector<8x128xf32>
    %205 = arith.divf %203, %204 : vector<8x128xf32>
    %206 = math.tanh %200 : vector<8x128xf32>
    %207 = vector.extract_strided_slice %205 {offsets = [0, 0], sizes = [8, 32], strides = [1, 1]} : vector<8x128xf32> to vector<8x32xf32>
    %208 = vector.extract_strided_slice %205 {offsets = [0, 32], sizes = [8, 32], strides = [1, 1]} : vector<8x128xf32> to vector<8x32xf32>
    %209 = vector.extract_strided_slice %206 {offsets = [0, 64], sizes = [8, 32], strides = [1, 1]} : vector<8x128xf32> to vector<8x32xf32>
    %210 = vector.extract_strided_slice %205 {offsets = [0, 96], sizes = [8, 32], strides = [1, 1]} : vector<8x128xf32> to vector<8x32xf32>
    %211 = arith.mulf %207, %190 : vector<8x32xf32>
    %212 = arith.mulf %208, %209 : vector<8x32xf32>
    %213 = arith.addf %211, %212 : vector<8x32xf32>
    %214 = math.tanh %213 : vector<8x32xf32>
    %215 = arith.mulf %210, %214 : vector<8x32xf32>
    %216 = vector.extract_strided_slice %14 {offsets = [48, 0], sizes = [8, 1], strides = [1, 1]} : vector<64x1xf32> to vector<8x1xf32>
    %217 = arith.subf %213, %190 : vector<8x32xf32>
    %218 = vector.broadcast %216 : vector<8x1xf32> to vector<8x32xf32>
    %219 = arith.mulf %218, %217 : vector<8x32xf32>
    %220 = arith.addf %190, %219 : vector<8x32xf32>
    %221 = arith.subf %215, %194 : vector<8x32xf32>
    %222 = vector.broadcast %216 : vector<8x1xf32> to vector<8x32xf32>
    %223 = arith.mulf %222, %221 : vector<8x32xf32>
    %224 = arith.addf %194, %223 : vector<8x32xf32>
    %225 = vector.broadcast %216 : vector<8x1xf32> to vector<8x32xf32>
    %226 = arith.mulf %225, %215 : vector<8x32xf32>
    %227 = arith.addf %197, %226 : vector<8x32xf32>
    %228 = vector.extract_strided_slice %12 {offsets = [56, 0], sizes = [8, 128], strides = [1, 1]} : vector<64x128xf32> to vector<8x128xf32>
    %cst_29 = arith.constant dense<0.000000e+00> : vector<8x128xf32>
    %229 = tpu.matmul %224, %13, %cst_29 {dimension_numbers = #tpu.dot_dimension_numbers<[1], [0], [0], [1], [0, 0, 1, 1], [], []>} : vector<8x32xf32>, vector<32x128xf32>, vector<8x128xf32> -> vector<8x128xf32>
    %230 = arith.addf %228, %229 : vector<8x128xf32>
    %231 = arith.negf %230 : vector<8x128xf32>
    %232 = math.exp %231 : vector<8x128xf32>
    %cst_30 = arith.constant 1.000000e+00 : f32
    %233 = vector.broadcast %cst_30 : f32 to vector<8x128xf32>
    %234 = arith.addf %233, %232 : vector<8x128xf32>
    %235 = arith.divf %233, %234 : vector<8x128xf32>
    %236 = math.tanh %230 : vector<8x128xf32>
    %237 = vector.extract_strided_slice %235 {offsets = [0, 0], sizes = [8, 32], strides = [1, 1]} : vector<8x128xf32> to vector<8x32xf32>
    %238 = vector.extract_strided_slice %235 {offsets = [0, 32], sizes = [8, 32], strides = [1, 1]} : vector<8x128xf32> to vector<8x32xf32>
    %239 = vector.extract_strided_slice %236 {offsets = [0, 64], sizes = [8, 32], strides = [1, 1]} : vector<8x128xf32> to vector<8x32xf32>
    %240 = vector.extract_strided_slice %235 {offsets = [0, 96], sizes = [8, 32], strides = [1, 1]} : vector<8x128xf32> to vector<8x32xf32>
    %241 = arith.mulf %237, %220 : vector<8x32xf32>
    %242 = arith.mulf %238, %239 : vector<8x32xf32>
    %243 = arith.addf %241, %242 : vector<8x32xf32>
    %244 = math.tanh %243 : vector<8x32xf32>
    %245 = arith.mulf %240, %244 : vector<8x32xf32>
    %246 = vector.extract_strided_slice %14 {offsets = [56, 0], sizes = [8, 1], strides = [1, 1]} : vector<64x1xf32> to vector<8x1xf32>
    %247 = vector.broadcast %246 : vector<8x1xf32> to vector<8x32xf32>
    %248 = arith.mulf %247, %245 : vector<8x32xf32>
    %249 = arith.addf %227, %248 : vector<8x32xf32>
    %cst_31 = arith.constant 1.000000e+00 : f32
    %cst_32 = arith.constant 8.000000e+00 : f32
    %250 = arith.divf %cst_31, %cst_32 : f32
    %251 = vector.broadcast %250 : f32 to vector<8x32xf32>
    %252 = arith.mulf %249, %251 : vector<8x32xf32>
    %c0_33 = arith.constant 0 : index
    %c0_34 = arith.constant 0 : index
    %253 = vector.load %arg6[%c0_33, %c0_34] : memref<32x128xf32, #tpu.memory_space<vmem>>, vector<32x128xf32>
    %cst_35 = arith.constant dense<0.000000e+00> : vector<8x128xf32>
    %254 = tpu.matmul %252, %253, %cst_35 {dimension_numbers = #tpu.dot_dimension_numbers<[1], [0], [0], [1], [0, 0, 1, 1], [], []>} : vector<8x32xf32>, vector<32x128xf32>, vector<8x128xf32> -> vector<8x128xf32>
    %c0_36 = arith.constant 0 : index
    %c0_37 = arith.constant 0 : index
    %255 = vector.load %arg7[%c0_36, %c0_37] : memref<1x128xf32, #tpu.memory_space<vmem>>, vector<1x128xf32>
    %256 = vector.broadcast %255 : vector<1x128xf32> to vector<8x128xf32>
    %257 = arith.addf %254, %256 : vector<8x128xf32>
    %258 = math.tanh %257 : vector<8x128xf32>
    %c0_38 = arith.constant 0 : index
    %c0_39 = arith.constant 0 : index
    %259 = vector.load %arg8[%c0_38, %c0_39] : memref<8x128xf32, #tpu.memory_space<vmem>>, vector<8x128xf32>
    tpu.vector_store %arg8[%c0_38, %c0_39], %258 {strides = array<i32>} : memref<8x128xf32, #tpu.memory_space<vmem>>, vector<8x128xf32>,
    return
  }
}

</mosaic_0001>

<llo_original>
// kernel: lstm_tagger_forward.1
$region0: #{lstm_tagger_forward.1}
  #allocation0 [shape = 'u32[]', space=smem, size = 0x4, offset = 0x4, fixed_abs, tag = 'smem constant byte address 0x4 - core index']
  #allocation1 [shape = 'u32[144,128]{1,0:T(1,128)}', space=vmem, size = 0x12000, scoped, tag = 'internal scratch']
  %s0 = inlined_call_operand.vmem [shape: s32[64,1], index: 0, kind: input, shape index: {}]
  %s1 = inlined_call_operand.vmem [shape: f32[64,1], index: 1, kind: input, shape index: {}]
  %s2 = inlined_call_operand.vmem [shape: f32[24,16], index: 2, kind: input, shape index: {}]
  %s3 = inlined_call_operand.vmem [shape: f32[16,128], index: 3, kind: input, shape index: {}]
  %s4 = inlined_call_operand.vmem [shape: f32[32,128], index: 4, kind: input, shape index: {}]
  %s5 = inlined_call_operand.vmem [shape: f32[1,128], index: 5, kind: input, shape index: {}]
  %s6 = inlined_call_operand.vmem [shape: f32[32,128], index: 6, kind: input, shape index: {}]
  %s7 = inlined_call_operand.vmem [shape: f32[1,128], index: 7, kind: input, shape index: {}]
  %s8 = inlined_call_operand.vmem [shape: f32[8,128], index: 8, kind: output, shape index: {}]
  %s9 = sld [smem:[#allocation0]]
  $region42: #{lstm_tagger_forward.1} parent=0
    _
  %s11 = ssub.s32 1, %s9
  %s12 = scalar_select 0, %s11, %s9
  // Predicated region
  $region2: #{lstm_tagger_forward.1} parent=0 // pred_check
    _
  $region3: #{lstm_tagger_forward.1} parent=0 // pred_check_branch
    %14 = sbr.rel (0) target = $region5
  $region4: #{lstm_tagger_forward.1} parent=0 // pred_region
    _
  $region5: #{lstm_tagger_forward.1} parent=0 // pred_fallthru
    _
  // Predicated region
  $region6: #{lstm_tagger_forward.1} parent=0 // pred_check
    _
  $region7: #{lstm_tagger_forward.1} parent=0 // pred_check_branch
    %16 = sbr.rel (0) target = $region9
  $region8: #{lstm_tagger_forward.1} parent=0 // pred_region
    _
  $region9: #{lstm_tagger_forward.1} parent=0 // pred_fallthru
    _
  // Predicated region
  $region10: #{lstm_tagger_forward.1} parent=0 // pred_check
    _
  $region11: #{lstm_tagger_forward.1} parent=0 // pred_check_branch
    %18 = sbr.rel (0) target = $region13
  $region12: #{lstm_tagger_forward.1} parent=0 // pred_region
    _
  $region13: #{lstm_tagger_forward.1} parent=0 // pred_fallthru
    _
  // Predicated region
  $region14: #{lstm_tagger_forward.1} parent=0 // pred_check
    _
  $region15: #{lstm_tagger_forward.1} parent=0 // pred_check_branch
    %20 = sbr.rel (0) target = $region17
  $region16: #{lstm_tagger_forward.1} parent=0 // pred_region
    _
  $region17: #{lstm_tagger_forward.1} parent=0 // pred_fallthru
    _
  // Predicated region
  $region18: #{lstm_tagger_forward.1} parent=0 // pred_check
    _
  $region19: #{lstm_tagger_forward.1} parent=0 // pred_check_branch
    %22 = sbr.rel (0) target = $region21
  $region20: #{lstm_tagger_forward.1} parent=0 // pred_region
    _
  $region21: #{lstm_tagger_forward.1} parent=0 // pred_fallthru
    _
  // Predicated region
  $region22: #{lstm_tagger_forward.1} parent=0 // pred_check
    _
  $region23: #{lstm_tagger_forward.1} parent=0 // pred_check_branch
    %24 = sbr.rel (0) target = $region25
  $region24: #{lstm_tagger_forward.1} parent=0 // pred_region
    _
  $region25: #{lstm_tagger_forward.1} parent=0 // pred_fallthru
    _
  // Predicated region
  $region26: #{lstm_tagger_forward.1} parent=0 // pred_check
    _
  $region27: #{lstm_tagger_forward.1} parent=0 // pred_check_branch
    %26 = sbr.rel (0) target = $region29
  $region28: #{lstm_tagger_forward.1} parent=0 // pred_region
    _
  $region29: #{lstm_tagger_forward.1} parent=0 // pred_fallthru
    _
  // Predicated region
  $region30: #{lstm_tagger_forward.1} parent=0 // pred_check
    _
  $region31: #{lstm_tagger_forward.1} parent=0 // pred_check_branch
    %28 = sbr.rel (0) target = $region33
  $region32: #{lstm_tagger_forward.1} parent=0 // pred_region
    _
  $region33: #{lstm_tagger_forward.1} parent=0 // pred_fallthru
    _
  %v29 = vld [vmem:[%s0] sm:$0xff]
  %v30 = vld [vmem:[%s0 + $0x8] sm:$0xff]
  %v31 = vld [vmem:[%s0 + $0x10] sm:$0xff]
  %v32 = vld [vmem:[%s0 + $0x18] sm:$0xff]
  %v33 = vld [vmem:[%s0 + $0x20] sm:$0xff]
  %v34 = vld [vmem:[%s0 + $0x28] sm:$0xff]
  %v35 = vld [vmem:[%s0 + $0x30] sm:$0xff]
  %v36 = vld [vmem:[%s0 + $0x38] sm:$0xff]
  %v37 = vlaneseq
  %v38 = vand.u32 %v37, 127
  %39 = vset.pattern.permute.xlu0 0
  %40 = vperm.xlu0 %39, %v29
  %v41 = vpop.permute.xlu0 %40
  %42 = vset.pattern.permute.xlu0 0
  %43 = vperm.xlu0 %42, %v30
  %v44 = vpop.permute.xlu0 %43
  %45 = vset.pattern.permute.xlu0 0
  %46 = vperm.xlu0 %45, %v31
  %v47 = vpop.permute.xlu0 %46
  %48 = vset.pattern.permute.xlu0 0
  %49 = vperm.xlu0 %48, %v32
  %v50 = vpop.permute.xlu0 %49
  %51 = vset.pattern.permute.xlu0 0
  %52 = vperm.xlu0 %51, %v33
  %v53 = vpop.permute.xlu0 %52
  %54 = vset.pattern.permute.xlu0 0
  %55 = vperm.xlu0 %54, %v34
  %v56 = vpop.permute.xlu0 %55
  %57 = vset.pattern.permute.xlu0 0
  %58 = vperm.xlu0 %57, %v35
  %v59 = vpop.permute.xlu0 %58
  %60 = vset.pattern.permute.xlu0 0
  %61 = vperm.xlu0 %60, %v36
  %v62 = vpop.permute.xlu0 %61
  %vm63 = vcmp.eq.s32.totalorder %v38, %v41
  %vm64 = vcmp.eq.s32.totalorder %v38, %v44
  %vm65 = vcmp.eq.s32.totalorder %v38, %v47
  %vm66 = vcmp.eq.s32.totalorder %v38, %v50
  %vm67 = vcmp.eq.s32.totalorder %v38, %v53
  %vm68 = vcmp.eq.s32.totalorder %v38, %v56
  %vm69 = vcmp.eq.s32.totalorder %v38, %v59
  %vm70 = vcmp.eq.s32.totalorder %v38, %v62
  %v71 = vsel %vm63, 1, 0
  %v72 = vsel %vm64, 1, 0
  %v73 = vsel %vm65, 1, 0
  %v74 = vsel %vm66, 1, 0
  %v75 = vsel %vm67, 1, 0
  %v76 = vsel %vm68, 1, 0
  %v77 = vsel %vm69, 1, 0
  %v78 = vsel %vm70, 1, 0
  %v79 = vcvt.s32.f32 %v71
  %v80 = vcvt.s32.f32 %v72
  %v81 = vcvt.s32.f32 %v73
  %v82 = vcvt.s32.f32 %v74
  %v83 = vcvt.s32.f32 %v75
  %v84 = vcvt.s32.f32 %v76
  %v85 = vcvt.s32.f32 %v77
  %v86 = vcvt.s32.f32 %v78
  %v87 = vld [vmem:[%s2] sm:$0xff]
  %v88 = vld [vmem:[%s2 + $0x8] sm:$0xff]
  %v89 = vld [vmem:[%s2 + $0x10] sm:$0xff]
  %vm90 = vcmask 195584
  %v92 = vsel %vm90, %v79, 0
  %v95 = vsel %vm90, %v80, 0
  %v98 = vsel %vm90, %v81, 0
  %v101 = vsel %vm90, %v82, 0
  %v104 = vsel %vm90, %v83, 0
  %v107 = vsel %vm90, %v84, 0
  %v110 = vsel %vm90, %v85, 0
  %v113 = vsel %vm90, %v86, 0
  %115 = vmatprep.subr.mxu0 0.0
  %116 = vmatpush1.msra.mxu0 %v87
  %117 = vmatprep.subr.mxu0 0.0
  %118 = vmatpush1.msra.mxu0 %v88
  %119 = vmatprep.subr.mxu0 0.0
  %120 = vmatpush1.msra.mxu0 %v89
  %121 = vmatprep.subr.mxu0 0.0
  %122 = vmatpush1.msra.mxu0 0.0
  %123 = vmatprep.subr.mxu0 0.0
  %124 = vmatpush1.msra.mxu0 0.0
  %125 = vmatprep.subr.mxu0 0.0
  %126 = vmatpush1.msra.mxu0 0.0
  %127 = vmatprep.subr.mxu0 0.0
  %128 = vmatpush1.msra.mxu0 0.0
  %129 = vmatprep.subr.mxu0 0.0
  %130 = vmatpush1.msra.mxu0 0.0
  %131 = vmatprep.subr.mxu0 0.0
  %132 = vmatpush1.msra.mxu0 0.0
  %133 = vmatprep.subr.mxu0 0.0
  %134 = vmatpush1.msra.mxu0 0.0
  %135 = vmatprep.subr.mxu0 0.0
  %136 = vmatpush1.msra.mxu0 0.0
  %137 = vmatprep.subr.mxu0 0.0
  %138 = vmatpush1.msra.mxu0 0.0
  %139 = vmatprep.subr.mxu0 0.0
  %140 = vmatpush1.msra.mxu0 0.0
  %141 = vmatprep.subr.mxu0 0.0
  %142 = vmatpush1.msra.mxu0 0.0
  %143 = vmatprep.subr.mxu0 0.0
  %144 = vmatpush1.msra.mxu0 0.0
  %145 = vmatprep.subr.mxu0 0.0
  %146 = vmatpush1.msra.mxu0 0.0
  %147 = vmatprep.subr.mxu0 0.0
  %148 = vmatpush1.msra.mxu0 0.0
  %149 = vmatprep.subr.mxu0 0.0
  %150 = vmatpush1.msra.mxu0 0.0
  %151 = vmatprep.subr.mxu0 0.0
  %152 = vmatpush1.msra.mxu0 0.0
  %153 = vmatprep.subr.mxu0 0.0
  %154 = vmatpush1.msra.mxu0 0.0
  %155 = vmatprep.subr.mxu0 0.0
  %156 = vmatpush1.msra.mxu0 0.0
  %157 = vmatprep.subr.mxu0 0.0
  %158 = vmatpush1.msra.mxu0 0.0
  %159 = vmatprep.subr.mxu0 0.0
  %160 = vmatpush1.msra.mxu0 0.0
  %161 = vmatprep.subr.mxu0 0.0
  %162 = vmatpush1.msra.mxu0 0.0
  %163 = vmatprep.subr.mxu0 0.0
  %164 = vmatpush1.msra.mxu0 0.0
  %165 = vmatprep.subr.mxu0 0.0
  %166 = vmatpush1.msra.mxu0 0.0
  %167 = vmatprep.subr.mxu0 0.0
  %168 = vmatpush1.msra.mxu0 0.0
  %169 = vmatprep.subr.mxu0 0.0
  %170 = vmatpush1.msra.mxu0 0.0
  %171 = vmatprep.subr.mxu0 0.0
  %172 = vmatpush1.msra.mxu0 0.0
  %173 = vmatprep.subr.mxu0 0.0
  %174 = vmatpush1.msra.mxu0 0.0
  %175 = vmatprep.subr.mxu0 0.0
  %176 = vmatpush1.msra.mxu0 0.0
  %177 = vmatprep.subr.mxu0 0.0
  %178 = vmatpush1.msra.mxu0 0.0
  %179 = vmatprep.mubr.f32.mxu0 0.0
  %180 = vmatmul.mubr.f32.gmra.mrb[0].mxu0 %v92
  %v181 = vpop.f32.mrb[0].mxu0
  %v182 = vadd.f32 0.0, %v181
  %v183 = vpop.f32.mrb[0].mxu0
  %184 = vmatprep.mubr.f32.mxu0 0.0
  %185 = vmatmul.mubr.f32.gmra.mrb[0].mxu0 %v95
  %v186 = vpop.f32.mrb[0].mxu0
  %v187 = vadd.f32 0.0, %v186
  %v188 = vpop.f32.mrb[0].mxu0
  %189 = vmatprep.mubr.f32.mxu0 0.0
  %190 = vmatmul.mubr.f32.gmra.mrb[0].mxu0 %v98
  %v191 = vpop.f32.mrb[0].mxu0
  %v192 = vadd.f32 0.0, %v191
  %v193 = vpop.f32.mrb[0].mxu0
  %194 = vmatprep.mubr.f32.mxu0 0.0
  %195 = vmatmul.mubr.f32.gmra.mrb[0].mxu0 %v101
  %v196 = vpop.f32.mrb[0].mxu0
  %v197 = vadd.f32 0.0, %v196
  %v198 = vpop.f32.mrb[0].mxu0
  %199 = vmatprep.mubr.f32.mxu0 0.0
  %200 = vmatmul.mubr.f32.gmra.mrb[0].mxu0 %v104
  %v201 = vpop.f32.mrb[0].mxu0
  %v202 = vadd.f32 0.0, %v201
  %v203 = vpop.f32.mrb[0].mxu0
  %204 = vmatprep.mubr.f32.mxu0 0.0
  %205 = vmatmul.mubr.f32.gmra.mrb[0].mxu0 %v107
  %v206 = vpop.f32.mrb[0].mxu0
  %v207 = vadd.f32 0.0, %v206
  %v208 = vpop.f32.mrb[0].mxu0
  %209 = vmatprep.mubr.f32.mxu0 0.0
  %210 = vmatmul.mubr.f32.gmra.mrb[0].mxu0 %v110
  %v211 = vpop.f32.mrb[0].mxu0
  %v212 = vadd.f32 0.0, %v211
  %v213 = vpop.f32.mrb[0].mxu0
  %214 = vmatprep.mubr.f32.mxu0 0.0
  %215 = vmatmul.mubr.f32.gmra.mrb[0].mxu0 %v113
  %v216 = vpop.f32.mrb[0].mxu0
  %v217 = vadd.f32 0.0, %v216
  %v218 = vpop.f32.mrb[0].mxu0
  %219 = vdwg.mxu0
  %v220 = vld [vmem:[%s3] sm:$0xff]
  %v221 = vld [vmem:[%s3 + $0x8] sm:$0xff]
  %v222 = vld [vmem:[%s5] sm:$0x1]
  %v224 = vlaneseq
  %v225 = vshrl.u32 %v224, 7
  %v226 = vsub.s32 0, %v225
  %v227 = vrot.slane %v222, %v226
  %vm229 = vcmask 130048
  %v231 = vsel %vm229, %v182, 0
  %v234 = vsel %vm229, %v187, 0
  %v237 = vsel %vm229, %v192, 0
  %v240 = vsel %vm229, %v197, 0
  %v243 = vsel %vm229, %v202, 0
  %v246 = vsel %vm229, %v207, 0
  %v249 = vsel %vm229, %v212, 0
  %v252 = vsel %vm229, %v217, 0
  %254 = vmatprep.subr.mxu0 0.0
  %255 = vmatpush1.msra.mxu0 %v220
  %256 = vmatprep.subr.mxu0 0.0
  %257 = vmatpush1.msra.mxu0 %v221
  %258 = vmatprep.subr.mxu0 0.0
  %259 = vmatpush1.msra.mxu0 0.0
  %260 = vmatprep.subr.mxu0 0.0
  %261 = vmatpush1.msra.mxu0 0.0
  %262 = vmatprep.subr.mxu0 0.0
  %263 = vmatpush1.msra.mxu0 0.0
  %264 = vmatprep.subr.mxu0 0.0
  %265 = vmatpush1.msra.mxu0 0.0
  %266 = vmatprep.subr.mxu0 0.0
  %267 = vmatpush1.msra.mxu0 0.0
  %268 = vmatprep.subr.mxu0 0.0
  %269 = vmatpush1.msra.mxu0 0.0
  %270 = vmatprep.subr.mxu0 0.0
  %271 = vmatpush1.msra.mxu0 0.0
  %272 = vmatprep.subr.mxu0 0.0
  %273 = vmatpush1.msra.mxu0 0.0
  %274 = vmatprep.subr.mxu0 0.0
  %275 = vmatpush1.msra.mxu0 0.0
  %276 = vmatprep.subr.mxu0 0.0
  %277 = vmatpush1.msra.mxu0 0.0
  %278 = vmatprep.subr.mxu0 0.0
  %279 = vmatpush1.msra.mxu0 0.0
  %280 = vmatprep.subr.mxu0 0.0
  %281 = vmatpush1.msra.mxu0 0.0
  %282 = vmatprep.subr.mxu0 0.0
  %283 = vmatpush1.msra.mxu0 0.0
  %284 = vmatprep.subr.mxu0 0.0
  %285 = vmatpush1.msra.mxu0 0.0
  %286 = vmatprep.subr.mxu0 0.0
  %287 = vmatpush1.msra.mxu0 0.0
  %288 = vmatprep.subr.mxu0 0.0
  %289 = vmatpush1.msra.mxu0 0.0
  %290 = vmatprep.subr.mxu0 0.0
  %291 = vmatpush1.msra.mxu0 0.0
  %292 = vmatprep.subr.mxu0 0.0
  %293 = vmatpush1.msra.mxu0 0.0
  %294 = vmatprep.subr.mxu0 0.0
  %295 = vmatpush1.msra.mxu0 0.0
  %296 = vmatprep.subr.mxu0 0.0
  %297 = vmatpush1.msra.mxu0 0.0
  %298 = vmatprep.subr.mxu0 0.0
  %299 = vmatpush1.msra.mxu0 0.0
  %300 = vmatprep.subr.mxu0 0.0
  %301 = vmatpush1.msra.mxu0 0.0
  %302 = vmatprep.subr.mxu0 0.0
  %303 = vmatpush1.msra.mxu0 0.0
  %304 = vmatprep.subr.mxu0 0.0
  %305 = vmatpush1.msra.mxu0 0.0
  %306 = vmatprep.subr.mxu0 0.0
  %307 = vmatpush1.msra.mxu0 0.0
  %308 = vmatprep.subr.mxu0 0.0
  %309 = vmatpush1.msra.mxu0 0.0
  %310 = vmatprep.subr.mxu0 0.0
  %311 = vmatpush1.msra.mxu0 0.0
  %312 = vmatprep.subr.mxu0 0.0
  %313 = vmatpush1.msra.mxu0 0.0
  %314 = vmatprep.subr.mxu0 0.0
  %315 = vmatpush1.msra.mxu0 0.0
  %316 = vmatprep.subr.mxu0 0.0
  %317 = vmatpush1.msra.mxu0 0.0
  %318 = vmatprep.mubr.f32.mxu0 0.0
  %319 = vmatmul.mubr.f32.gmra.mrb[0].mxu0 %v231
  %v320 = vpop.f32.mrb[0].mxu0
  %v321 = vadd.f32 %v227, %v320
  %v322 = vpop.f32.mrb[0].mxu0
  %323 = vmatprep.mubr.f32.mxu0 0.0
  %324 = vmatmul.mubr.f32.gmra.mrb[0].mxu0 %v234
  %v325 = vpop.f32.mrb[0].mxu0
  %v326 = vadd.f32 %v227, %v325
  %v327 = vpop.f32.mrb[0].mxu0
  %328 = vmatprep.mubr.f32.mxu0 0.0
  %329 = vmatmul.mubr.f32.gmra.mrb[0].mxu0 %v237
  %v330 = vpop.f32.mrb[0].mxu0
  %v331 = vadd.f32 %v227, %v330
  %v332 = vpop.f32.mrb[0].mxu0
  %333 = vmatprep.mubr.f32.mxu0 0.0
  %334 = vmatmul.mubr.f32.gmra.mrb[0].mxu0 %v240
  %v335 = vpop.f32.mrb[0].mxu0
  %v336 = vadd.f32 %v227, %v335
  %v337 = vpop.f32.mrb[0].mxu0
  %338 = vmatprep.mubr.f32.mxu0 0.0
  %339 = vmatmul.mubr.f32.gmra.mrb[0].mxu0 %v243
  %v340 = vpop.f32.mrb[0].mxu0
  %v341 = vadd.f32 %v227, %v340
  %v342 = vpop.f32.mrb[0].mxu0
  %343 = vmatprep.mubr.f32.mxu0 0.0
  %344 = vmatmul.mubr.f32.gmra.mrb[0].mxu0 %v246
  %v345 = vpop.f32.mrb[0].mxu0
  %v346 = vadd.f32 %v227, %v345
  %v347 = vpop.f32.mrb[0].mxu0
  %348 = vmatprep.mubr.f32.mxu0 0.0
  %349 = vmatmul.mubr.f32.gmra.mrb[0].mxu0 %v249
  %v350 = vpop.f32.mrb[0].mxu0
  %v351 = vadd.f32 %v227, %v350
  %v352 = vpop.f32.mrb[0].mxu0
  %353 = vmatprep.mubr.f32.mxu0 0.0
  %354 = vmatmul.mubr.f32.gmra.mrb[0].mxu0 %v252
  %v355 = vpop.f32.mrb[0].mxu0
  %v356 = vadd.f32 %v227, %v355
  %v357 = vpop.f32.mrb[0].mxu0
  %358 = vdwg.mxu0
  %v359 = vld [vmem:[%s4] sm:$0xff]
  %v360 = vld [vmem:[%s4 + $0x8] sm:$0xff]
  %v361 = vld [vmem:[%s4 + $0x10] sm:$0xff]
  %v362 = vld [vmem:[%s4 + $0x18] sm:$0xff]
  %v363 = vld [vmem:[%s1] sm:$0xff]
  %v364 = vld [vmem:[%s1 + $0x8] sm:$0xff]
  %v365 = vld [vmem:[%s1 + $0x10] sm:$0xff]
  %v366 = vld [vmem:[%s1 + $0x18] sm:$0xff]
  %v367 = vld [vmem:[%s1 + $0x20] sm:$0xff]
  %v368 = vld [vmem:[%s1 + $0x28] sm:$0xff]
  %v369 = vld [vmem:[%s1 + $0x30] sm:$0xff]
  %v370 = vld [vmem:[%s1 + $0x38] sm:$0xff]
  %vm371 = vcmask 261120
  %v373 = vsel %vm371, 0.0, 0
  %375 = vmatprep.subr.mxu0 0.0
  %376 = vmatpush1.msra.mxu0 %v359
  %377 = vmatprep.subr.mxu0 0.0
  %378 = vmatpush1.msra.mxu0 %v360
  %379 = vmatprep.subr.mxu0 0.0
  %380 = vmatpush1.msra.mxu0 %v361
  %381 = vmatprep.subr.mxu0 0.0
  %382 = vmatpush1.msra.mxu0 %v362
  %383 = vmatprep.subr.mxu0 0.0
  %384 = vmatpush1.msra.mxu0 0.0
  %385 = vmatprep.subr.mxu0 0.0
  %386 = vmatpush1.msra.mxu0 0.0
  %387 = vmatprep.subr.mxu0 0.0
  %388 = vmatpush1.msra.mxu0 0.0
  %389 = vmatprep.subr.mxu0 0.0
  %390 = vmatpush1.msra.mxu0 0.0
  %391 = vmatprep.subr.mxu0 0.0
  %392 = vmatpush1.msra.mxu0 0.0
  %393 = vmatprep.subr.mxu0 0.0
  %394 = vmatpush1.msra.mxu0 0.0
  %395 = vmatprep.subr.mxu0 0.0
  %396 = vmatpush1.msra.mxu0 0.0
  %397 = vmatprep.subr.mxu0 0.0
  %398 = vmatpush1.msra.mxu0 0.0
  %399 = vmatprep.subr.mxu0 0.0
  %400 = vmatpush1.msra.mxu0 0.0
  %401 = vmatprep.subr.mxu0 0.0
  %402 = vmatpush1.msra.mxu0 0.0
  %403 = vmatprep.subr.mxu0 0.0
  %404 = vmatpush1.msra.mxu0 0.0
  %405 = vmatprep.subr.mxu0 0.0
  %406 = vmatpush1.msra.mxu0 0.0
  %407 = vmatprep.subr.mxu0 0.0
  %408 = vmatpush1.msra.mxu0 0.0
  %409 = vmatprep.subr.mxu0 0.0
  %410 = vmatpush1.msra.mxu0 0.0
  %411 = vmatprep.subr.mxu0 0.0
  %412 = vmatpush1.msra.mxu0 0.0
  %413 = vmatprep.subr.mxu0 0.0
  %414 = vmatpush1.msra.mxu0 0.0
  %415 = vmatprep.subr.mxu0 0.0
  %416 = vmatpush1.msra.mxu0 0.0
  %417 = vmatprep.subr.mxu0 0.0
  %418 = vmatpush1.msra.mxu0 0.0
  %419 = vmatprep.subr.mxu0 0.0
  %420 = vmatpush1.msra.mxu0 0.0
  %421 = vmatprep.subr.mxu0 0.0
  %422 = vmatpush1.msra.mxu0 0.0
  %423 = vmatprep.subr.mxu0 0.0
  %424 = vmatpush1.msra.mxu0 0.0
  %425 = vmatprep.subr.mxu0 0.0
  %426 = vmatpush1.msra.mxu0 0.0
  %427 = vmatprep.subr.mxu0 0.0
  %428 = vmatpush1.msra.mxu0 0.0
  %429 = vmatprep.subr.mxu0 0.0
  %430 = vmatpush1.msra.mxu0 0.0
  %431 = vmatprep.subr.mxu0 0.0
  %432 = vmatpush1.msra.mxu0 0.0
  %433 = vmatprep.subr.mxu0 0.0
  %434 = vmatpush1.msra.mxu0 0.0
  %435 = vmatprep.subr.mxu0 0.0
  %436 = vmatpush1.msra.mxu0 0.0
  %437 = vmatprep.subr.mxu0 0.0
  %438 = vmatpush1.msra.mxu0 0.0
  %439 = vmatprep.mubr.f32.mxu0 0.0
  %440 = vmatmul.mubr.f32.gmra.mrb[0].mxu0 %v373
  %v441 = vpop.f32.mrb[0].mxu0
  %v442 = vadd.f32 0.0, %v441
  %v443 = vpop.f32.mrb[0].mxu0
  %444 = vdwg.mxu0
  %v445 = vadd.f32 %v321, %v442
  %v446 = vxor.u32 %v445, 2147483648
  %v447 = vmul.f32 %v446, 1.442695
  %v448 = vpow.pop %v447
  %v449 = vadd.f32 %v448, 1.0
  %v450 = vrcp.pop %v449
  %v451 = vmul.f32 1.0, %v450
  %v452 = vtanh.pop %v445
  %v453 = vmul.f32 %v451, 0.0
  %455 = vrot.lane.b32.xlu0 %v452, 96
  %v456 = vpop.permute.xlu0 %455
  %v458 = vmul.f32 %v451, %v456
  %460 = vrot.lane.b32.xlu0 %v458, 96
  %v461 = vpop.permute.xlu0 %460
  %v463 = vadd.f32 %v453, %v461
  %v464 = vtanh.pop %v463
  %466 = vrot.lane.b32.xlu0 %v464, 96
  %v467 = vpop.permute.xlu0 %466
  %v469 = vmul.f32 %v451, %v467
  %471 = vset.pattern.permute.xlu0 0
  %472 = vperm.xlu0 %471, %v363
  %v473 = vpop.permute.xlu0 %472
  %v475 = vmul.f32 %v473, %v463
  %v476 = vadd.f32 %v475, 0.0
  %v477 = vmul.f32 %v473, %v469
  %v478 = vadd.f32 %v477, 0.0
  %480 = vrot.lane.b32.xlu0 %v478, 32
  %v481 = vpop.permute.xlu0 %480
  %v482 = vsel %vm371, %v481, 0
  %484 = vmatprep.subr.mxu0 0.0
  %485 = vmatpush1.msra.mxu0 %v359
  %486 = vmatprep.subr.mxu0 0.0
  %487 = vmatpush1.msra.mxu0 %v360
  %488 = vmatprep.subr.mxu0 0.0
  %489 = vmatpush1.msra.mxu0 %v361
  %490 = vmatprep.subr.mxu0 0.0
  %491 = vmatpush1.msra.mxu0 %v362
  %492 = vmatprep.subr.mxu0 0.0
  %493 = vmatpush1.msra.mxu0 0.0
  %494 = vmatprep.subr.mxu0 0.0
  %495 = vmatpush1.msra.mxu0 0.0
  %496 = vmatprep.subr.mxu0 0.0
  %497 = vmatpush1.msra.mxu0 0.0
  %498 = vmatprep.subr.mxu0 0.0
  %499 = vmatpush1.msra.mxu0 0.0
  %500 = vmatprep.subr.mxu0 0.0
  %501 = vmatpush1.msra.mxu0 0.0
  %502 = vmatprep.subr.mxu0 0.0
  %503 = vmatpush1.msra.mxu0 0.0
  %504 = vmatprep.subr.mxu0 0.0
  %505 = vmatpush1.msra.mxu0 0.0
  %506 = vmatprep.subr.mxu0 0.0
  %507 = vmatpush1.msra.mxu0 0.0
  %508 = vmatprep.subr.mxu0 0.0
  %509 = vmatpush1.msra.mxu0 0.0
  %510 = vmatprep.subr.mxu0 0.0
  %511 = vmatpush1.msra.mxu0 0.0
  %512 = vmatprep.subr.mxu0 0.0
  %513 = vmatpush1.msra.mxu0 0.0
  %514 = vmatprep.subr.mxu0 0.0
  %515 = vmatpush1.msra.mxu0 0.0
  %516 = vmatprep.subr.mxu0 0.0
  %517 = vmatpush1.msra.mxu0 0.0
  %518 = vmatprep.subr.mxu0 0.0
  %519 = vmatpush1.msra.mxu0 0.0
  %520 = vmatprep.subr.mxu0 0.0
  %521 = vmatpush1.msra.mxu0 0.0
  %522 = vmatprep.subr.mxu0 0.0
  %523 = vmatpush1.msra.mxu0 0.0
  %524 = vmatprep.subr.mxu0 0.0
  %525 = vmatpush1.msra.mxu0 0.0
  %526 = vmatprep.subr.mxu0 0.0
  %527 = vmatpush1.msra.mxu0 0.0
  %528 = vmatprep.subr.mxu0 0.0
  %529 = vmatpush1.msra.mxu0 0.0
  %530 = vmatprep.subr.mxu0 0.0
  %531 = vmatpush1.msra.mxu0 0.0
  %532 = vmatprep.subr.mxu0 0.0
  %533 = vmatpush1.msra.mxu0 0.0
  %534 = vmatprep.subr.mxu0 0.0
  %535 = vmatpush1.msra.mxu0 0.0
  %536 = vmatprep.subr.mxu0 0.0
  %537 = vmatpush1.msra.mxu0 0.0
  %538 = vmatprep.subr.mxu0 0.0
  %539 = vmatpush1.msra.mxu0 0.0
  %540 = vmatprep.subr.mxu0 0.0
  %541 = vmatpush1.msra.mxu0 0.0
  %542 = vmatprep.subr.mxu0 0.0
  %543 = vmatpush1.msra.mxu0 0.0
  %544 = vmatprep.subr.mxu0 0.0
  %545 = vmatpush1.msra.mxu0 0.0
  %546 = vmatprep.subr.mxu0 0.0
  %547 = vmatpush1.msra.mxu0 0.0
  %548 = vmatprep.mubr.f32.mxu0 0.0
  %549 = vmatmul.mubr.f32.gmra.mrb[0].mxu0 %v482
  %v550 = vpop.f32.mrb[0].mxu0
  %v551 = vadd.f32 0.0, %v550
  %v552 = vpop.f32.mrb[0].mxu0
  %553 = vdwg.mxu0
  %v554 = vadd.f32 %v326, %v551
  %v555 = vxor.u32 %v554, 2147483648
  %v556 = vmul.f32 %v555, 1.442695
  %v557 = vpow.pop %v556
  %v558 = vadd.f32 %v557, 1.0
  %v559 = vrcp.pop %v558
  %v560 = vmul.f32 1.0, %v559
  %v561 = vtanh.pop %v554
  %v562 = vmul.f32 %v560, %v476
  %564 = vrot.lane.b32.xlu0 %v561, 96
  %v565 = vpop.permute.xlu0 %564
  %v567 = vmul.f32 %v560, %v565
  %569 = vrot.lane.b32.xlu0 %v567, 96
  %v570 = vpop.permute.xlu0 %569
  %v572 = vadd.f32 %v562, %v570
  %v573 = vtanh.pop %v572
  %575 = vrot.lane.b32.xlu0 %v573, 96
  %v576 = vpop.permute.xlu0 %575
  %v578 = vmul.f32 %v560, %v576
  %v579 = vsub.f32 %v572, %v476
  %581 = vset.pattern.permute.xlu0 0
  %582 = vperm.xlu0 %581, %v364
  %v583 = vpop.permute.xlu0 %582
  %v585 = vmul.f32 %v583, %v579
  %v586 = vadd.f32 %v476, %v585
  %v587 = vsub.f32 %v578, %v478
  %v588 = vmul.f32 %v583, %v587
  %v589 = vadd.f32 %v478, %v588
  %v590 = vmul.f32 %v583, %v578
  %v591 = vadd.f32 %v478, %v590
  %593 = vrot.lane.b32.xlu0 %v589, 32
  %v594 = vpop.permute.xlu0 %593
  %v595 = vsel %vm371, %v594, 0
  %597 = vmatprep.subr.mxu0 0.0
  %598 = vmatpush1.msra.mxu0 %v359
  %599 = vmatprep.subr.mxu0 0.0
  %600 = vmatpush1.msra.mxu0 %v360
  %601 = vmatprep.subr.mxu0 0.0
  %602 = vmatpush1.msra.mxu0 %v361
  %603 = vmatprep.subr.mxu0 0.0
  %604 = vmatpush1.msra.mxu0 %v362
  %605 = vmatprep.subr.mxu0 0.0
  %606 = vmatpush1.msra.mxu0 0.0
  %607 = vmatprep.subr.mxu0 0.0
  %608 = vmatpush1.msra.mxu0 0.0
  %609 = vmatprep.subr.mxu0 0.0
  %610 = vmatpush1.msra.mxu0 0.0
  %611 = vmatprep.subr.mxu0 0.0
  %612 = vmatpush1.msra.mxu0 0.0
  %613 = vmatprep.subr.mxu0 0.0
  %614 = vmatpush1.msra.mxu0 0.0
  %615 = vmatprep.subr.mxu0 0.0
  %616 = vmatpush1.msra.mxu0 0.0
  %617 = vmatprep.subr.mxu0 0.0
  %618 = vmatpush1.msra.mxu0 0.0
  %619 = vmatprep.subr.mxu0 0.0
  %620 = vmatpush1.msra.mxu0 0.0
  %621 = vmatprep.subr.mxu0 0.0
  %622 = vmatpush1.msra.mxu0 0.0
  %623 = vmatprep.subr.mxu0 0.0
  %624 = vmatpush1.msra.mxu0 0.0
  %625 = vmatprep.subr.mxu0 0.0
  %626 = vmatpush1.msra.mxu0 0.0
  %627 = vmatprep.subr.mxu0 0.0
  %628 = vmatpush1.msra.mxu0 0.0
  %629 = vmatprep.subr.mxu0 0.0
  %630 = vmatpush1.msra.mxu0 0.0
  %631 = vmatprep.subr.mxu0 0.0
  %632 = vmatpush1.msra.mxu0 0.0
  %633 = vmatprep.subr.mxu0 0.0
  %634 = vmatpush1.msra.mxu0 0.0
  %635 = vmatprep.subr.mxu0 0.0
  %636 = vmatpush1.msra.mxu0 0.0
  %637 = vmatprep.subr.mxu0 0.0
  %638 = vmatpush1.msra.mxu0 0.0
  %639 = vmatprep.subr.mxu0 0.0
  %640 = vmatpush1.msra.mxu0 0.0
  %641 = vmatprep.subr.mxu0 0.0
  %642 = vmatpush1.msra.mxu0 0.0
  %643 = vmatprep.subr.mxu0 0.0
  %644 = vmatpush1.msra.mxu0 0.0
  %645 = vmatprep.subr.mxu0 0.0
  %646 = vmatpush1.msra.mxu0 0.0
  %647 = vmatprep.subr.mxu0 0.0
  %648 = vmatpush1.msra.mxu0 0.0
  %649 = vmatprep.subr.mxu0 0.0
  %650 = vmatpush1.msra.mxu0 0.0
  %651 = vmatprep.subr.mxu0 0.0
  %652 = vmatpush1.msra.mxu0 0.0
  %653 = vmatprep.subr.mxu0 0.0
  %654 = vmatpush1.msra.mxu0 0.0
  %655 = vmatprep.subr.mxu0 0.0
  %656 = vmatpush1.msra.mxu0 0.0
  %657 = vmatprep.subr.mxu0 0.0
  %658 = vmatpush1.msra.mxu0 0.0
  %659 = vmatprep.subr.mxu0 0.0
  %660 = vmatpush1.msra.mxu0 0.0
  %661 = vmatprep.mubr.f32.mxu0 0.0
  %662 = vmatmul.mubr.f32.gmra.mrb[0].mxu0 %v595
  %v663 = vpop.f32.mrb[0].mxu0
  %v664 = vadd.f32 0.0, %v663
  %v665 = vpop.f32.mrb[0].mxu0
  %666 = vdwg.mxu0
  %v667 = vadd.f32 %v331, %v664
  %v668 = vxor.u32 %v667, 2147483648
  %v669 = vmul.f32 %v668, 1.442695
  %v670 = vpow.pop %v669
  %v671 = vadd.f32 %v670, 1.0
  %v672 = vrcp.pop %v671
  %v673 = vmul.f32 1.0, %v672
  %v674 = vtanh.pop %v667
  %v675 = vmul.f32 %v673, %v586
  %677 = vrot.lane.b32.xlu0 %v674, 96
  %v678 = vpop.permute.xlu0 %677
  %v680 = vmul.f32 %v673, %v678
  %682 = vrot.lane.b32.xlu0 %v680, 96
  %v683 = vpop.permute.xlu0 %682
  %v685 = vadd.f32 %v675, %v683
  %v686 = vtanh.pop %v685
  %688 = vrot.lane.b32.xlu0 %v686, 96
  %v689 = vpop.permute.xlu0 %688
  %v691 = vmul.f32 %v673, %v689
  %v692 = vsub.f32 %v685, %v586
  %694 = vset.pattern.permute.xlu0 0
  %695 = vperm.xlu0 %694, %v365
  %v696 = vpop.permute.xlu0 %695
  %v698 = vmul.f32 %v696, %v692
  %v699 = vadd.f32 %v586, %v698
  %v700 = vsub.f32 %v691, %v589
  %v701 = vmul.f32 %v696, %v700
  %v702 = vadd.f32 %v589, %v701
  %v703 = vmul.f32 %v696, %v691
  %v704 = vadd.f32 %v591, %v703
  %706 = vrot.lane.b32.xlu0 %v702, 32
  %v707 = vpop.permute.xlu0 %706
  %v708 = vsel %vm371, %v707, 0
  %710 = vmatprep.subr.mxu0 0.0
  %711 = vmatpush1.msra.mxu0 %v359
  %712 = vmatprep.subr.mxu0 0.0
  %713 = vmatpush1.msra.mxu0 %v360
  %714 = vmatprep.subr.mxu0 0.0
  %715 = vmatpush1.msra.mxu0 %v361
  %716 = vmatprep.subr.mxu0 0.0
  %717 = vmatpush1.msra.mxu0 %v362
  %718 = vmatprep.subr.mxu0 0.0
  %719 = vmatpush1.msra.mxu0 0.0
  %720 = vmatprep.subr.mxu0 0.0
  %721 = vmatpush1.msra.mxu0 0.0
  %722 = vmatprep.subr.mxu0 0.0
  %723 = vmatpush1.msra.mxu0 0.0
  %724 = vmatprep.subr.mxu0 0.0
  %725 = vmatpush1.msra.mxu0 0.0
  %726 = vmatprep.subr.mxu0 0.0
  %727 = vmatpush1.msra.mxu0 0.0
  %728 = vmatprep.subr.mxu0 0.0
  %729 = vmatpush1.msra.mxu0 0.0
  %730 = vmatprep.subr.mxu0 0.0
  %731 = vmatpush1.msra.mxu0 0.0
  %732 = vmatprep.subr.mxu0 0.0
  %733 = vmatpush1.msra.mxu0 0.0
  %734 = vmatprep.subr.mxu0 0.0
  %735 = vmatpush1.msra.mxu0 0.0
  %736 = vmatprep.subr.mxu0 0.0
  %737 = vmatpush1.msra.mxu0 0.0
  %738 = vmatprep.subr.mxu0 0.0
  %739 = vmatpush1.msra.mxu0 0.0
  %740 = vmatprep.subr.mxu0 0.0
  %741 = vmatpush1.msra.mxu0 0.0
  %742 = vmatprep.subr.mxu0 0.0
  %743 = vmatpush1.msra.mxu0 0.0
  %744 = vmatprep.subr.mxu0 0.0
  %745 = vmatpush1.msra.mxu0 0.0
  %746 = vmatprep.subr.mxu0 0.0
  %747 = vmatpush1.msra.mxu0 0.0
  %748 = vmatprep.subr.mxu0 0.0
  %749 = vmatpush1.msra.mxu0 0.0
  %750 = vmatprep.subr.mxu0 0.0
  %751 = vmatpush1.msra.mxu0 0.0
  %752 = vmatprep.subr.mxu0 0.0
  %753 = vmatpush1.msra.mxu0 0.0
  %754 = vmatprep.subr.mxu0 0.0
  %755 = vmatpush1.msra.mxu0 0.0
  %756 = vmatprep.subr.mxu0 0.0
  %757 = vmatpush1.msra.mxu0 0.0
  %758 = vmatprep.subr.mxu0 0.0
  %759 = vmatpush1.msra.mxu0 0.0
  %760 = vmatprep.subr.mxu0 0.0
  %761 = vmatpush1.msra.mxu0 0.0
  %762 = vmatprep.subr.mxu0 0.0
  %763 = vmatpush1.msra.mxu0 0.0
  %764 = vmatprep.subr.mxu0 0.0
  %765 = vmatpush1.msra.mxu0 0.0
  %766 = vmatprep.subr.mxu0 0.0
  %767 = vmatpush1.msra.mxu0 0.0
  %768 = vmatprep.subr.mxu0 0.0
  %769 = vmatpush1.msra.mxu0 0.0
  %770 = vmatprep.subr.mxu0 0.0
  %771 = vmatpush1.msra.mxu0 0.0
  %772 = vmatprep.subr.mxu0 0.0
  %773 = vmatpush1.msra.mxu0 0.0
  %774 = vmatprep.mubr.f32.mxu0 0.0
  %775 = vmatmul.mubr.f32.gmra.mrb[0].mxu0 %v708
  %v776 = vpop.f32.mrb[0].mxu0
  %v777 = vadd.f32 0.0, %v776
  %v778 = vpop.f32.mrb[0].mxu0
  %779 = vdwg.mxu0
  %v780 = vadd.f32 %v336, %v777
  %v781 = vxor.u32 %v780, 2147483648
  %v782 = vmul.f32 %v781, 1.442695
  %v783 = vpow.pop %v782
  %v784 = vadd.f32 %v783, 1.0
  %v785 = vrcp.pop %v784
  %v786 = vmul.f32 1.0, %v785
  %v787 = vtanh.pop %v780
  %v788 = vmul.f32 %v786, %v699
  %790 = vrot.lane.b32.xlu0 %v787, 96
  %v791 = vpop.permute.xlu0 %790
  %v793 = vmul.f32 %v786, %v791
  %795 = vrot.lane.b32.xlu0 %v793, 96
  %v796 = vpop.permute.xlu0 %795
  %v798 = vadd.f32 %v788, %v796
  %v799 = vtanh.pop %v798
  %801 = vrot.lane.b32.xlu0 %v799, 96
  %v802 = vpop.permute.xlu0 %801
  %v804 = vmul.f32 %v786, %v802
  %v805 = vsub.f32 %v798, %v699
  %807 = vset.pattern.permute.xlu0 0
  %808 = vperm.xlu0 %807, %v366
  %v809 = vpop.permute.xlu0 %808
  %v811 = vmul.f32 %v809, %v805
  %v812 = vadd.f32 %v699, %v811
  %v813 = vsub.f32 %v804, %v702
  %v814 = vmul.f32 %v809, %v813
  %v815 = vadd.f32 %v702, %v814
  %v816 = vmul.f32 %v809, %v804
  %v817 = vadd.f32 %v704, %v816
  %819 = vrot.lane.b32.xlu0 %v815, 32
  %v820 = vpop.permute.xlu0 %819
  %v821 = vsel %vm371, %v820, 0
  %823 = vmatprep.subr.mxu0 0.0
  %824 = vmatpush1.msra.mxu0 %v359
  %825 = vmatprep.subr.mxu0 0.0
  %826 = vmatpush1.msra.mxu0 %v360
  %827 = vmatprep.subr.mxu0 0.0
  %828 = vmatpush1.msra.mxu0 %v361
  %829 = vmatprep.subr.mxu0 0.0
  %830 = vmatpush1.msra.mxu0 %v362
  %831 = vmatprep.subr.mxu0 0.0
  %832 = vmatpush1.msra.mxu0 0.0
  %833 = vmatprep.subr.mxu0 0.0
  %834 = vmatpush1.msra.mxu0 0.0
  %835 = vmatprep.subr.mxu0 0.0
  %836 = vmatpush1.msra.mxu0 0.0
  %837 = vmatprep.subr.mxu0 0.0
  %838 = vmatpush1.msra.mxu0 0.0
  %839 = vmatprep.subr.mxu0 0.0
  %840 = vmatpush1.msra.mxu0 0.0
  %841 = vmatprep.subr.mxu0 0.0
  %842 = vmatpush1.msra.mxu0 0.0
  %843 = vmatprep.subr.mxu0 0.0
  %844 = vmatpush1.msra.mxu0 0.0
  %845 = vmatprep.subr.mxu0 0.0
  %846 = vmatpush1.msra.mxu0 0.0
  %847 = vmatprep.subr.mxu0 0.0
  %848 = vmatpush1.msra.mxu0 0.0
  %849 = vmatprep.subr.mxu0 0.0
  %850 = vmatpush1.msra.mxu0 0.0
  %851 = vmatprep.subr.mxu0 0.0
  %852 = vmatpush1.msra.mxu0 0.0
  %853 = vmatprep.subr.mxu0 0.0
  %854 = vmatpush1.msra.mxu0 0.0
  %855 = vmatprep.subr.mxu0 0.0
  %856 = vmatpush1.msra.mxu0 0.0
  %857 = vmatprep.subr.mxu0 0.0
  %858 = vmatpush1.msra.mxu0 0.0
  %859 = vmatprep.subr.mxu0 0.0
  %860 = vmatpush1.msra.mxu0 0.0
  %861 = vmatprep.subr.mxu0 0.0
  %862 = vmatpush1.msra.mxu0 0.0
  %863 = vmatprep.subr.mxu0 0.0
  %864 = vmatpush1.msra.mxu0 0.0
  %865 = vmatprep.subr.mxu0 0.0
  %866 = vmatpush1.msra.mxu0 0.0
  %867 = vmatprep.subr.mxu0 0.0
  %868 = vmatpush1.msra.mxu0 0.0
  %869 = vmatprep.subr.mxu0 0.0
  %870 = vmatpush1.msra.mxu0 0.0
  %871 = vmatprep.subr.mxu0 0.0
  %872 = vmatpush1.msra.mxu0 0.0
  %873 = vmatprep.subr.mxu0 0.0
  %874 = vmatpush1.msra.mxu0 0.0
  %875 = vmatprep.subr.mxu0 0.0
  %876 = vmatpush1.msra.mxu0 0.0
  %877 = vmatprep.subr.mxu0 0.0
  %878 = vmatpush1.msra.mxu0 0.0
  %879 = vmatprep.subr.mxu0 0.0
  %880 = vmatpush1.msra.mxu0 0.0
  %881 = vmatprep.subr.mxu0 0.0
  %882 = vmatpush1.msra.mxu0 0.0
  %883 = vmatprep.subr.mxu0 0.0
  %884 = vmatpush1.msra.mxu0 0.0
  %885 = vmatprep.subr.mxu0 0.0
  %886 = vmatpush1.msra.mxu0 0.0
  %887 = vmatprep.mubr.f32.mxu0 0.0
  %888 = vmatmul.mubr.f32.gmra.mrb[0].mxu0 %v821
  %v889 = vpop.f32.mrb[0].mxu0
  %v890 = vadd.f32 0.0, %v889
  %v891 = vpop.f32.mrb[0].mxu0
  %892 = vdwg.mxu0
  %v893 = vadd.f32 %v341, %v890
  %v894 = vxor.u32 %v893, 2147483648
  %v895 = vmul.f32 %v894, 1.442695
  %v896 = vpow.pop %v895
  %v897 = vadd.f32 %v896, 1.0
  %v898 = vrcp.pop %v897
  %v899 = vmul.f32 1.0, %v898
  %v900 = vtanh.pop %v893
  %v901 = vmul.f32 %v899, %v812
  %903 = vrot.lane.b32.xlu0 %v900, 96
  %v904 = vpop.permute.xlu0 %903
  %v906 = vmul.f32 %v899, %v904
  %908 = vrot.lane.b32.xlu0 %v906, 96
  %v909 = vpop.permute.xlu0 %908
  %v911 = vadd.f32 %v901, %v909
  %v912 = vtanh.pop %v911
  %914 = vrot.lane.b32.xlu0 %v912, 96
  %v915 = vpop.permute.xlu0 %914
  %v917 = vmul.f32 %v899, %v915
  %v918 = vsub.f32 %v911, %v812
  %920 = vset.pattern.permute.xlu0 0
  %921 = vperm.xlu0 %920, %v367
  %v922 = vpop.permute.xlu0 %921
  %v924 = vmul.f32 %v922, %v918
  %v925 = vadd.f32 %v812, %v924
  %v926 = vsub.f32 %v917, %v815
  %v927 = vmul.f32 %v922, %v926
  %v928 = vadd.f32 %v815, %v927
  %v929 = vmul.f32 %v922, %v917
  %v930 = vadd.f32 %v817, %v929
  %932 = vrot.lane.b32.xlu0 %v928, 32
  %v933 = vpop.permute.xlu0 %932
  %v934 = vsel %vm371, %v933, 0
  %936 = vmatprep.subr.mxu0 0.0
  %937 = vmatpush1.msra.mxu0 %v359
  %938 = vmatprep.subr.mxu0 0.0
  %939 = vmatpush1.msra.mxu0 %v360
  %940 = vmatprep.subr.mxu0 0.0
  %941 = vmatpush1.msra.mxu0 %v361
  %942 = vmatprep.subr.mxu0 0.0
  %943 = vmatpush1.msra.mxu0 %v362
  %944 = vmatprep.subr.mxu0 0.0
  %945 = vmatpush1.msra.mxu0 0.0
  %946 = vmatprep.subr.mxu0 0.0
  %947 = vmatpush1.msra.mxu0 0.0
  %948 = vmatprep.subr.mxu0 0.0
  %949 = vmatpush1.msra.mxu0 0.0
  %950 = vmatprep.subr.mxu0 0.0
  %951 = vmatpush1.msra.mxu0 0.0
  %952 = vmatprep.subr.mxu0 0.0
  %953 = vmatpush1.msra.mxu0 0.0
  %954 = vmatprep.subr.mxu0 0.0
  %955 = vmatpush1.msra.mxu0 0.0
  %956 = vmatprep.subr.mxu0 0.0
  %957 = vmatpush1.msra.mxu0 0.0
  %958 = vmatprep.subr.mxu0 0.0
  %959 = vmatpush1.msra.mxu0 0.0
  %960 = vmatprep.subr.mxu0 0.0
  %961 = vmatpush1.msra.mxu0 0.0
  %962 = vmatprep.subr.mxu0 0.0
  %963 = vmatpush1.msra.mxu0 0.0
  %964 = vmatprep.subr.mxu0 0.0
  %965 = vmatpush1.msra.mxu0 0.0
  %966 = vmatprep.subr.mxu0 0.0
  %967 = vmatpush1.msra.mxu0 0.0
  %968 = vmatprep.subr.mxu0 0.0
  %969 = vmatpush1.msra.mxu0 0.0
  %970 = vmatprep.subr.mxu0 0.0
  %971 = vmatpush1.msra.mxu0 0.0
  %972 = vmatprep.subr.mxu0 0.0
  %973 = vmatpush1.msra.mxu0 0.0
  %974 = vmatprep.subr.mxu0 0.0
  %975 = vmatpush1.msra.mxu0 0.0
  %976 = vmatprep.subr.mxu0 0.0
  %977 = vmatpush1.msra.mxu0 0.0
  %978 = vmatprep.subr.mxu0 0.0
  %979 = vmatpush1.msra.mxu0 0.0
  %980 = vmatprep.subr.mxu0 0.0
  %981 = vmatpush1.msra.mxu0 0.0
  %982 = vmatprep.subr.mxu0 0.0
  %983 = vmatpush1.msra.mxu0 0.0
  %984 = vmatprep.subr.mxu0 0.0
  %985 = vmatpush1.msra.mxu0 0.0
  %986 = vmatprep.subr.mxu0 0.0
  %987 = vmatpush1.msra.mxu0 0.0
  %988 = vmatprep.subr.mxu0 0.0
  %989 = vmatpush1.msra.mxu0 0.0
  %990 = vmatprep.subr.mxu0 0.0
  %991 = vmatpush1.msra.mxu0 0.0
  %992 = vmatprep.subr.mxu0 0.0
  %993 = vmatpush1.msra.mxu0 0.0
  %994 = vmatprep.subr.mxu0 0.0
  %995 = vmatpush1.msra.mxu0 0.0
  %996 = vmatprep.subr.mxu0 0.0
  %997 = vmatpush1.msra.mxu0 0.0
  %998 = vmatprep.subr.mxu0 0.0
  %999 = vmatpush1.msra.mxu0 0.0
  %1000 = vmatprep.mubr.f32.mxu0 0.0
  %1001 = vmatmul.mubr.f32.gmra.mrb[0].mxu0 %v934
  %v1002 = vpop.f32.mrb[0].mxu0
  %v1003 = vadd.f32 0.0, %v1002
  %v1004 = vpop.f32.mrb[0].mxu0
  %1005 = vdwg.mxu0
  %v1006 = vadd.f32 %v346, %v1003
  %v1007 = vxor.u32 %v1006, 2147483648
  %v1008 = vmul.f32 %v1007, 1.442695
  %v1009 = vpow.pop %v1008
  %v1010 = vadd.f32 %v1009, 1.0
  %v1011 = vrcp.pop %v1010
  %v1012 = vmul.f32 1.0, %v1011
  %v1013 = vtanh.pop %v1006
  %v1014 = vmul.f32 %v1012, %v925
  %1016 = vrot.lane.b32.xlu0 %v1013, 96
  %v1017 = vpop.permute.xlu0 %1016
  %v1019 = vmul.f32 %v1012, %v1017
  %1021 = vrot.lane.b32.xlu0 %v1019, 96
  %v1022 = vpop.permute.xlu0 %1021
  %v1024 = vadd.f32 %v1014, %v1022
  %v1025 = vtanh.pop %v1024
  %1027 = vrot.lane.b32.xlu0 %v1025, 96
  %v1028 = vpop.permute.xlu0 %1027
  %v1030 = vmul.f32 %v1012, %v1028
  %v1031 = vsub.f32 %v1024, %v925
  %1033 = vset.pattern.permute.xlu0 0
  %1034 = vperm.xlu0 %1033, %v368
  %v1035 = vpop.permute.xlu0 %1034
  %v1037 = vmul.f32 %v1035, %v1031
  %v1038 = vadd.f32 %v925, %v1037
  %v1039 = vsub.f32 %v1030, %v928
  %v1040 = vmul.f32 %v1035, %v1039
  %v1041 = vadd.f32 %v928, %v1040
  %v1042 = vmul.f32 %v1035, %v1030
  %v1043 = vadd.f32 %v930, %v1042
  %1045 = vrot.lane.b32.xlu0 %v1041, 32
  %v1046 = vpop.permute.xlu0 %1045
  %v1047 = vsel %vm371, %v1046, 0
  %1049 = vmatprep.subr.mxu0 0.0
  %1050 = vmatpush1.msra.mxu0 %v359
  %1051 = vmatprep.subr.mxu0 0.0
  %1052 = vmatpush1.msra.mxu0 %v360
  %1053 = vmatprep.subr.mxu0 0.0
  %1054 = vmatpush1.msra.mxu0 %v361
  %1055 = vmatprep.subr.mxu0 0.0
  %1056 = vmatpush1.msra.mxu0 %v362
  %1057 = vmatprep.subr.mxu0 0.0
  %1058 = vmatpush1.msra.mxu0 0.0
  %1059 = vmatprep.subr.mxu0 0.0
  %1060 = vmatpush1.msra.mxu0 0.0
  %1061 = vmatprep.subr.mxu0 0.0
  %1062 = vmatpush1.msra.mxu0 0.0
  %1063 = vmatprep.subr.mxu0 0.0
  %1064 = vmatpush1.msra.mxu0 0.0
  %1065 = vmatprep.subr.mxu0 0.0
  %1066 = vmatpush1.msra.mxu0 0.0
  %1067 = vmatprep.subr.mxu0 0.0
  %1068 = vmatpush1.msra.mxu0 0.0
  %1069 = vmatprep.subr.mxu0 0.0
  %1070 = vmatpush1.msra.mxu0 0.0
  %1071 = vmatprep.subr.mxu0 0.0
  %1072 = vmatpush1.msra.mxu0 0.0
  %1073 = vmatprep.subr.mxu0 0.0
  %1074 = vmatpush1.msra.mxu0 0.0
  %1075 = vmatprep.subr.mxu0 0.0
  %1076 = vmatpush1.msra.mxu0 0.0
  %1077 = vmatprep.subr.mxu0 0.0
  %1078 = vmatpush1.msra.mxu0 0.0
  %1079 = vmatprep.subr.mxu0 0.0
  %1080 = vmatpush1.msra.mxu0 0.0
  %1081 = vmatprep.subr.mxu0 0.0
  %1082 = vmatpush1.msra.mxu0 0.0
  %1083 = vmatprep.subr.mxu0 0.0
  %1084 = vmatpush1.msra.mxu0 0.0
  %1085 = vmatprep.subr.mxu0 0.0
  %1086 = vmatpush1.msra.mxu0 0.0
  %1087 = vmatprep.subr.mxu0 0.0
  %1088 = vmatpush1.msra.mxu0 0.0
  %1089 = vmatprep.subr.mxu0 0.0
  %1090 = vmatpush1.msra.mxu0 0.0
  %1091 = vmatprep.subr.mxu0 0.0
  %1092 = vmatpush1.msra.mxu0 0.0
  %1093 = vmatprep.subr.mxu0 0.0
  %1094 = vmatpush1.msra.mxu0 0.0
  %1095 = vmatprep.subr.mxu0 0.0
  %1096 = vmatpush1.msra.mxu0 0.0
  %1097 = vmatprep.subr.mxu0 0.0
  %1098 = vmatpush1.msra.mxu0 0.0
  %1099 = vmatprep.subr.mxu0 0.0
  %1100 = vmatpush1.msra.mxu0 0.0
  %1101 = vmatprep.subr.mxu0 0.0
  %1102 = vmatpush1.msra.mxu0 0.0
  %1103 = vmatprep.subr.mxu0 0.0
  %1104 = vmatpush1.msra.mxu0 0.0
  %1105 = vmatprep.subr.mxu0 0.0
  %1106 = vmatpush1.msra.mxu0 0.0
  %1107 = vmatprep.subr.mxu0 0.0
  %1108 = vmatpush1.msra.mxu0 0.0
  %1109 = vmatprep.subr.mxu0 0.0
  %1110 = vmatpush1.msra.mxu0 0.0
  %1111 = vmatprep.subr.mxu0 0.0
  %1112 = vmatpush1.msra.mxu0 0.0
  %1113 = vmatprep.mubr.f32.mxu0 0.0
  %1114 = vmatmul.mubr.f32.gmra.mrb[0].mxu0 %v1047
  %v1115 = vpop.f32.mrb[0].mxu0
  %v1116 = vadd.f32 0.0, %v1115
  %v1117 = vpop.f32.mrb[0].mxu0
  %1118 = vdwg.mxu0
  %v1119 = vadd.f32 %v351, %v1116
  %v1120 = vxor.u32 %v1119, 2147483648
  %v1121 = vmul.f32 %v1120, 1.442695
  %v1122 = vpow.pop %v1121
  %v1123 = vadd.f32 %v1122, 1.0
  %v1124 = vrcp.pop %v1123
  %v1125 = vmul.f32 1.0, %v1124
  %v1126 = vtanh.pop %v1119
  %v1127 = vmul.f32 %v1125, %v1038
  %1129 = vrot.lane.b32.xlu0 %v1126, 96
  %v1130 = vpop.permute.xlu0 %1129
  %v1132 = vmul.f32 %v1125, %v1130
  %1134 = vrot.lane.b32.xlu0 %v1132, 96
  %v1135 = vpop.permute.xlu0 %1134
  %v1137 = vadd.f32 %v1127, %v1135
  %v1138 = vtanh.pop %v1137
  %1140 = vrot.lane.b32.xlu0 %v1138, 96
  %v1141 = vpop.permute.xlu0 %1140
  %v1143 = vmul.f32 %v1125, %v1141
  %v1144 = vsub.f32 %v1137, %v1038
  %1146 = vset.pattern.permute.xlu0 0
  %1147 = vperm.xlu0 %1146, %v369
  %v1148 = vpop.permute.xlu0 %1147
  %v1150 = vmul.f32 %v1148, %v1144
  %v1151 = vadd.f32 %v1038, %v1150
  %v1152 = vsub.f32 %v1143, %v1041
  %v1153 = vmul.f32 %v1148, %v1152
  %v1154 = vadd.f32 %v1041, %v1153
  %v1155 = vmul.f32 %v1148, %v1143
  %v1156 = vadd.f32 %v1043, %v1155
  %1158 = vrot.lane.b32.xlu0 %v1154, 32
  %v1159 = vpop.permute.xlu0 %1158
  %v1160 = vsel %vm371, %v1159, 0
  %1162 = vmatprep.subr.mxu0 0.0
  %1163 = vmatpush1.msra.mxu0 %v359
  %1164 = vmatprep.subr.mxu0 0.0
  %1165 = vmatpush1.msra.mxu0 %v360
  %1166 = vmatprep.subr.mxu0 0.0
  %1167 = vmatpush1.msra.mxu0 %v361
  %1168 = vmatprep.subr.mxu0 0.0
  %1169 = vmatpush1.msra.mxu0 %v362
  %1170 = vmatprep.subr.mxu0 0.0
  %1171 = vmatpush1.msra.mxu0 0.0
  %1172 = vmatprep.subr.mxu0 0.0
  %1173 = vmatpush1.msra.mxu0 0.0
  %1174 = vmatprep.subr.mxu0 0.0
  %1175 = vmatpush1.msra.mxu0 0.0
  %1176 = vmatprep.subr.mxu0 0.0
  %1177 = vmatpush1.msra.mxu0 0.0
  %1178 = vmatprep.subr.mxu0 0.0
  %1179 = vmatpush1.msra.mxu0 0.0
  %1180 = vmatprep.subr.mxu0 0.0
  %1181 = vmatpush1.msra.mxu0 0.0
  %1182 = vmatprep.subr.mxu0 0.0
  %1183 = vmatpush1.msra.mxu0 0.0
  %1184 = vmatprep.subr.mxu0 0.0
  %1185 = vmatpush1.msra.mxu0 0.0
  %1186 = vmatprep.subr.mxu0 0.0
  %1187 = vmatpush1.msra.mxu0 0.0
  %1188 = vmatprep.subr.mxu0 0.0
  %1189 = vmatpush1.msra.mxu0 0.0
  %1190 = vmatprep.subr.mxu0 0.0
  %1191 = vmatpush1.msra.mxu0 0.0
  %1192 = vmatprep.subr.mxu0 0.0
  %1193 = vmatpush1.msra.mxu0 0.0
  %1194 = vmatprep.subr.mxu0 0.0
  %1195 = vmatpush1.msra.mxu0 0.0
  %1196 = vmatprep.subr.mxu0 0.0
  %1197 = vmatpush1.msra.mxu0 0.0
  %1198 = vmatprep.subr.mxu0 0.0
  %1199 = vmatpush1.msra.mxu0 0.0
  %1200 = vmatprep.subr.mxu0 0.0
  %1201 = vmatpush1.msra.mxu0 0.0
  %1202 = vmatprep.subr.mxu0 0.0
  %1203 = vmatpush1.msra.mxu0 0.0
  %1204 = vmatprep.subr.mxu0 0.0
  %1205 = vmatpush1.msra.mxu0 0.0
  %1206 = vmatprep.subr.mxu0 0.0
  %1207 = vmatpush1.msra.mxu0 0.0
  %1208 = vmatprep.subr.mxu0 0.0
  %1209 = vmatpush1.msra.mxu0 0.0
  %1210 = vmatprep.subr.mxu0 0.0
  %1211 = vmatpush1.msra.mxu0 0.0
  %1212 = vmatprep.subr.mxu0 0.0
  %1213 = vmatpush1.msra.mxu0 0.0
  %1214 = vmatprep.subr.mxu0 0.0
  %1215 = vmatpush1.msra.mxu0 0.0
  %1216 = vmatprep.subr.mxu0 0.0
  %1217 = vmatpush1.msra.mxu0 0.0
  %1218 = vmatprep.subr.mxu0 0.0
  %1219 = vmatpush1.msra.mxu0 0.0
  %1220 = vmatprep.subr.mxu0 0.0
  %1221 = vmatpush1.msra.mxu0 0.0
  %1222 = vmatprep.subr.mxu0 0.0
  %1223 = vmatpush1.msra.mxu0 0.0
  %1224 = vmatprep.subr.mxu0 0.0
  %1225 = vmatpush1.msra.mxu0 0.0
  %1226 = vmatprep.mubr.f32.mxu0 0.0
  %1227 = vmatmul.mubr.f32.gmra.mrb[0].mxu0 %v1160
  %v1228 = vpop.f32.mrb[0].mxu0
  %v1229 = vadd.f32 0.0, %v1228
  %v1230 = vpop.f32.mrb[0].mxu0
  %1231 = vdwg.mxu0
  %v1232 = vadd.f32 %v356, %v1229
  %v1233 = vxor.u32 %v1232, 2147483648
  %v1234 = vmul.f32 %v1233, 1.442695
  %v1235 = vpow.pop %v1234
  %v1236 = vadd.f32 %v1235, 1.0
  %v1237 = vrcp.pop %v1236
  %v1238 = vmul.f32 1.0, %v1237
  %v1239 = vtanh.pop %v1232
  %v1240 = vmul.f32 %v1238, %v1151
  %1242 = vrot.lane.b32.xlu0 %v1239, 96
  %v1243 = vpop.permute.xlu0 %1242
  %v1245 = vmul.f32 %v1238, %v1243
  %1247 = vrot.lane.b32.xlu0 %v1245, 96
  %v1248 = vpop.permute.xlu0 %1247
  %v1250 = vadd.f32 %v1240, %v1248
  %v1251 = vtanh.pop %v1250
  %1253 = vrot.lane.b32.xlu0 %v1251, 96
  %v1254 = vpop.permute.xlu0 %1253
  %v1256 = vmul.f32 %v1238, %v1254
  %1258 = vset.pattern.permute.xlu0 0
  %1259 = vperm.xlu0 %1258, %v370
  %v1260 = vpop.permute.xlu0 %1259
  %v1262 = vmul.f32 %v1260, %v1256
  %v1263 = vadd.f32 %v1156, %v1262
  %v1264 = vmul.f32 %v1263, 0.125
  %v1265 = vld [vmem:[%s6] sm:$0xff]
  %v1266 = vld [vmem:[%s6 + $0x8] sm:$0xff]
  %v1267 = vld [vmem:[%s6 + $0x10] sm:$0xff]
  %v1268 = vld [vmem:[%s6 + $0x18] sm:$0xff]
  %v1269 = vld [vmem:[%s7] sm:$0x1]
  %v1271 = vlaneseq
  %v1272 = vshrl.u32 %v1271, 7
  %v1273 = vsub.s32 0, %v1272
  %v1274 = vrot.slane %v1269, %v1273
  %1277 = vrot.lane.b32.xlu0 %v1264, 32
  %v1278 = vpop.permute.xlu0 %1277
  %v1279 = vsel %vm371, %v1278, 0
  %1281 = vmatprep.subr.mxu0 0.0
  %1282 = vmatpush1.msra.mxu0 %v1265
  %1283 = vmatprep.subr.mxu0 0.0
  %1284 = vmatpush1.msra.mxu0 %v1266
  %1285 = vmatprep.subr.mxu0 0.0
  %1286 = vmatpush1.msra.mxu0 %v1267
  %1287 = vmatprep.subr.mxu0 0.0
  %1288 = vmatpush1.msra.mxu0 %v1268
  %1289 = vmatprep.subr.mxu0 0.0
  %1290 = vmatpush1.msra.mxu0 0.0
  %1291 = vmatprep.subr.mxu0 0.0
  %1292 = vmatpush1.msra.mxu0 0.0
  %1293 = vmatprep.subr.mxu0 0.0
  %1294 = vmatpush1.msra.mxu0 0.0
  %1295 = vmatprep.subr.mxu0 0.0
  %1296 = vmatpush1.msra.mxu0 0.0
  %1297 = vmatprep.subr.mxu0 0.0
  %1298 = vmatpush1.msra.mxu0 0.0
  %1299 = vmatprep.subr.mxu0 0.0
  %1300 = vmatpush1.msra.mxu0 0.0
  %1301 = vmatprep.subr.mxu0 0.0
  %1302 = vmatpush1.msra.mxu0 0.0
  %1303 = vmatprep.subr.mxu0 0.0
  %1304 = vmatpush1.msra.mxu0 0.0
  %1305 = vmatprep.subr.mxu0 0.0
  %1306 = vmatpush1.msra.mxu0 0.0
  %1307 = vmatprep.subr.mxu0 0.0
  %1308 = vmatpush1.msra.mxu0 0.0
  %1309 = vmatprep.subr.mxu0 0.0
  %1310 = vmatpush1.msra.mxu0 0.0
  %1311 = vmatprep.subr.mxu0 0.0
  %1312 = vmatpush1.msra.mxu0 0.0
  %1313 = vmatprep.subr.mxu0 0.0
  %1314 = vmatpush1.msra.mxu0 0.0
  %1315 = vmatprep.subr.mxu0 0.0
  %1316 = vmatpush1.msra.mxu0 0.0
  %1317 = vmatprep.subr.mxu0 0.0
  %1318 = vmatpush1.msra.mxu0 0.0
  %1319 = vmatprep.subr.mxu0 0.0
  %1320 = vmatpush1.msra.mxu0 0.0
  %1321 = vmatprep.subr.mxu0 0.0
  %1322 = vmatpush1.msra.mxu0 0.0
  %1323 = vmatprep.subr.mxu0 0.0
  %1324 = vmatpush1.msra.mxu0 0.0
  %1325 = vmatprep.subr.mxu0 0.0
  %1326 = vmatpush1.msra.mxu0 0.0
  %1327 = vmatprep.subr.mxu0 0.0
  %1328 = vmatpush1.msra.mxu0 0.0
  %1329 = vmatprep.subr.mxu0 0.0
  %1330 = vmatpush1.msra.mxu0 0.0
  %1331 = vmatprep.subr.mxu0 0.0
  %1332 = vmatpush1.msra.mxu0 0.0
  %1333 = vmatprep.subr.mxu0 0.0
  %1334 = vmatpush1.msra.mxu0 0.0
  %1335 = vmatprep.subr.mxu0 0.0
  %1336 = vmatpush1.msra.mxu0 0.0
  %1337 = vmatprep.subr.mxu0 0.0
  %1338 = vmatpush1.msra.mxu0 0.0
  %1339 = vmatprep.subr.mxu0 0.0
  %1340 = vmatpush1.msra.mxu0 0.0
  %1341 = vmatprep.subr.mxu0 0.0
  %1342 = vmatpush1.msra.mxu0 0.0
  %1343 = vmatprep.subr.mxu0 0.0
  %1344 = vmatpush1.msra.mxu0 0.0
  %1345 = vmatprep.mubr.f32.mxu0 0.0
  %1346 = vmatmul.mubr.f32.gmra.mrb[0].mxu0 %v1279
  %v1347 = vpop.f32.mrb[0].mxu0
  %v1348 = vadd.f32 %v1274, %v1347
  %v1349 = vpop.f32.mrb[0].mxu0
  %1350 = vdwg.mxu0
  %v1351 = vtanh.pop %v1348
  %1352 = vst [vmem:[%s8] sm:$0xff] %v1351
  // Predicated region
  $region34: #{lstm_tagger_forward.1} parent=0 // pred_check
    _
  $region35: #{lstm_tagger_forward.1} parent=0 // pred_check_branch
    %1354 = sbr.rel (0) target = $region37
  $region36: #{lstm_tagger_forward.1} parent=0 // pred_region
    _
  $region37: #{lstm_tagger_forward.1} parent=0 // pred_fallthru
    _
  // Predicated region
  $region38: #{lstm_tagger_forward.1} parent=0 // pred_check
    _
  $region39: #{lstm_tagger_forward.1} parent=0 // pred_check_branch
    %1356 = sbr.rel (0) target = $region41
  $region40: #{lstm_tagger_forward.1} parent=0 // pred_region
    _
  $region41: #{lstm_tagger_forward.1} parent=0 // pred_fallthru
    _

</llo_original>
